<compile_context>
chip_gen: v7x
topology: tpu7x:2x2x1
jax: 0.10.0
libtpu: 0.0.40
codegen_flags: <defaults>
</compile_context>

<pallas_src>
import numpy as np
from functools import lru_cache

import jax
import jax.numpy as jnp
from jax.experimental import pallas as pl
from jax.experimental.pallas import tpu as pltpu


_NEG_BIG = -1e30   # log-domain "minus infinity" for padded support columns


# --------------------------------------------------------------------------
# small helpers
# --------------------------------------------------------------------------

def _round_up(v, m):
    return ((v + m - 1) // m) * m


def _largest_tile(P, cap):
    """Largest multiple of 128 that divides P and is <= cap."""
    best, d = 128, 128
    while d <= min(P, cap):
        if P % d == 0:
            best = d
        d += 128
    return best


def _choose_tiles(n_max):
    P = _round_up(max(int(n_max), 1), 128)
    TR = _largest_tile(P, 512)      # row tile  (sublane axis of the z tile)
    TS = _largest_tile(P, 1024)     # col tile  (lane axis / reduction axis)
    return P, TR, TS


# --------------------------------------------------------------------------
# Pallas kernel:  out[g, i] = LSE_j( w'[g, j] + rows_scaled[g, i] . cols[g, j] )
# (online logsumexp over column tiles; flash-attention style accumulators)
# --------------------------------------------------------------------------

def _fused_softmin_kernel(dims_ref, rows_ref, cols_ref, wlog_ref, out_ref,
                          m_sc, l_sc):
    # dims_ref : SMEM (G, 2) int32   [n_rows, n_cols] per stacked OT problem
    # rows_ref : VMEM (1, TR, Dp)    query points, pre-scaled by 1/eps
    # cols_ref : VMEM (1, Dp, TS)    support points, feature-major (lane-dense)
    # wlog_ref : VMEM (1, 1, TS)     w'_j = wlog_j - ||y_j||^2/(2 eps) (lane-dense)
    # out_ref  : VMEM (1, TR, 1)     LSE_j(z[i, j]) for this row tile
    # m_sc,l_sc: VMEM (TR, 1)        online-LSE running max / running sum
    g = pl.program_id(0)
    r = pl.program_id(1)
    s = pl.program_id(2)
    tr = rows_ref.shape[1]
    ts = cols_ref.shape[2]

    @pl.when(s == 0)
    def _():
        m_sc[...] = jnp.full_like(m_sc, -jnp.inf)
        l_sc[...] = jnp.zeros_like(l_sc)

    n_rows = dims_ref[g, 0]
    n_cols = dims_ref[g, 1]
    row_valid = r * tr < n_rows
    col_valid = s * ts < n_cols

    # Skip tiles that are entirely padding (column tiles past n_cols never
    # contribute; row tiles past n_rows are discarded by the wrapper).
    @pl.when(jnp.logical_and(row_valid, col_valid))
    def _():
        xr = rows_ref[0]                                       # (TR, Dp)
        xc = cols_ref[0]                                       # (Dp, TS)
        w = wlog_ref[0]                                        # (1, TS)
        xy = jnp.dot(xr, xc,
                     precision=jax.lax.Precision.HIGHEST,      # K = Dp tiny
                     preferred_element_type=jnp.float32)       # (TR, TS)
        z = xy + w                                             # (TR, TS)

        m_prev = m_sc[...]                                     # (TR, 1)
        m_new = jnp.maximum(m_prev, jnp.max(z, axis=-1, keepdims=True))
        corr = jnp.exp(m_prev - m_new)                         # 0 when m_prev=-inf
        l_sc[...] = corr * l_sc[...] + jnp.sum(jnp.exp(z - m_new),
                                               axis=-1, keepdims=True)
        m_sc[...] = m_new

    @pl.when(s == pl.num_programs(2) - 1)
    def _():
        lse = m_sc[...] + jnp.log(l_sc[...])
        # fully-padded row tiles never ran the body -> write a harmless 0
        out_ref[0] = jnp.where(row_valid, lse, 0.0)


@lru_cache(maxsize=None)
def _build_softmin_call(G, P, TR, TS, Dp):
    grid = (G, P // TR, P // TS)
    return pl.pallas_call(
        _fused_softmin_kernel,
        out_shape=jax.ShapeDtypeStruct((G, P, 1), jnp.float32),
        grid=grid,
        in_specs=[
            pl.BlockSpec(memory_space=pltpu.MemorySpace.SMEM),        # dims
            pl.BlockSpec((1, TR, Dp), lambda g, r, s: (g, r, 0)),     # rows/eps
            pl.BlockSpec((1, Dp, TS), lambda g, r, s: (g, 0, s)),     # cols
            pl.BlockSpec((1, 1, TS), lambda g, r, s: (g, 0, s)),      # w'
        ],
        out_specs=pl.BlockSpec((1, TR, 1), lambda g, r, s: (g, r, 0)),
        scratch_shapes=[pltpu.VMEM((TR, 1), jnp.float32),
                        pltpu.VMEM((TR, 1), jnp.float32)],
        compiler_params=pltpu.CompilerParams(
            dimension_semantics=("parallel", "parallel", "arbitrary")),
    )


# --------------------------------------------------------------------------
# Sinkhorn machinery
# --------------------------------------------------------------------------

def log_weights(a):
    return jnp.where(a > 0, jnp.log(jnp.maximum(a, 1e-38)), -1e5)


def dampening(eps, rho):
    return 1.0 if rho is None else 1.0 / (1.0 + eps / rho)


def max_diameter(x, y):
    mins = jnp.minimum(jnp.min(x, axis=0), jnp.min(y, axis=0))
    maxs = jnp.maximum(jnp.max(x, axis=0), jnp.max(y, axis=0))
    return float(jnp.sqrt(jnp.sum((maxs - mins) ** 2)))


def epsilon_schedule(p, diameter, blur, scaling):
    return ([diameter ** p]
            + [float(np.exp(e)) for e in
               np.arange(p * np.log(diameter), p * np.log(blur),
                         p * np.log(scaling))]
            + [blur ** p])


def scaling_parameters(x, y, p, blur, reach, diameter, scaling):
    if diameter is None:
        # NOTE: one device->host readback per forward (same as the reference);
        # pass `diameter=` explicitly to keep the whole forward asynchronous.
        D = x.shape[-1]
        diameter = max_diameter(x.reshape(-1, D), y.reshape(-1, D))
    eps = blur ** p
    eps_s = epsilon_schedule(p, diameter, blur, scaling)
    rho = None if reach is None else reach ** p
    return diameter, eps, eps_s, rho


def sinkhorn_cost(eps, rho, alpha, beta, a_x, b_y, a_y, b_x):
    if rho is None:    # balanced, debiased Sinkhorn divergence
        return (jnp.sum(alpha * (b_x - a_x), axis=-1)
                + jnp.sum(beta * (a_y - b_y), axis=-1))
    # TODO(synk): unbalanced branch (reach != None) not implemented.
    raise NotImplementedError("reach != None is not supported")


def sinkhorn_loop(softmin, a_log, b_log, C_xx, C_yy, C_xy, C_yx, eps_s, rho):
    """Generic (un-fused) loop; used by the pure-JAX reference."""
    eps = eps_s[0]
    lam = dampening(eps, rho)
    a_x = lam * softmin(eps, C_xx, a_log)
    b_y = lam * softmin(eps, C_yy, b_log)
    a_y = lam * softmin(eps, C_yx, a_log)
    b_x = lam * softmin(eps, C_xy, b_log)

    for eps in eps_s:
        lam = dampening(eps, rho)
        at_y = lam * softmin(eps, C_yx, a_log + b_x / eps)
        bt_x = lam * softmin(eps, C_xy, b_log + a_y / eps)
        at_x = lam * softmin(eps, C_xx, a_log + a_x / eps)
        bt_y = lam * softmin(eps, C_yy, b_log + b_y / eps)
        a_y, b_x = 0.5 * (a_y + at_y), 0.5 * (b_x + bt_x)
        a_x, b_y = 0.5 * (a_x + at_x), 0.5 * (b_y + bt_y)

    eps = eps_s[-1]
    lam = dampening(eps, rho)
    a_y, b_x = (lam * softmin(eps, C_yx, a_log + b_x / eps),
                lam * softmin(eps, C_xy, b_log + a_y / eps))
    a_x, b_y = (lam * softmin(eps, C_xx, a_log + a_x / eps),
                lam * softmin(eps, C_yy, b_log + b_y / eps))
    return a_x, b_y, a_y, b_x


def _sinkhorn_loop_fused(call, dims, rows, cols, rows_nh, cols_nh,
                         a_log_p, b_log_p, eps_s, rho):
    """Batched (4-problems-in-1) Sinkhorn epsilon-scaling loop on padded data."""
    G, P, _ = rows.shape
    B = a_log_p.shape[0]

    def softmin4(eps, wlog4):
        #  softmin(eps, C, wlog)_i
        #    = ||r_i||^2/2 - eps * LSE_j( wlog_j - ||c_j||^2/(2 eps) + r_i.c_j/eps )
        inv = 1.0 / eps
        wprime = (wlog4 - cols_nh * inv).reshape(G, 1, P)
        lse = call(dims, rows * inv, cols, wprime).reshape(4, B, P)
        return rows_nh - eps * lse

    eps = eps_s[0]
    lam = dampening(eps, rho)
    f = lam * softmin4(eps, jnp.stack([a_log_p, b_log_p, a_log_p, b_log_p], 0))
    a_x, b_y, a_y, b_x = f[0], f[1], f[2], f[3]

    for eps in eps_s:                       # epsilon-scaling descent
        lam = dampening(eps, rho)
        inv = 1.0 / eps
        f = lam * softmin4(eps, jnp.stack([a_log_p + a_x * inv,
                                           b_log_p + b_y * inv,
                                           a_log_p + b_x * inv,
                                           b_log_p + a_y * inv], 0))
        at_x, bt_y, at_y, bt_x = f[0], f[1], f[2], f[3]
        a_y, b_x = 0.5 * (a_y + at_y), 0.5 * (b_x + bt_x)
        a_x, b_y = 0.5 * (a_x + at_x), 0.5 * (b_y + bt_y)

    eps = eps_s[-1]                         # final extrapolation
    lam = dampening(eps, rho)
    inv = 1.0 / eps
    f = lam * softmin4(eps, jnp.stack([a_log_p + a_x * inv,
                                       b_log_p + b_y * inv,
                                       a_log_p + b_x * inv,
                                       b_log_p + a_y * inv], 0))
    return f[0], f[1], f[2], f[3]


@lru_cache(maxsize=None)
def _make_run(B, N, M, D, eps_s, rho):
    """Builds (once per static config) the jitted end-to-end forward program."""
    eps_s = list(eps_s)
    P, TR, TS = _choose_tiles(max(N, M))
    Dp = _round_up(max(D, 1), 8)
    G = 4 * B
    call = _build_softmin_call(G, P, TR, TS, Dp)

    # slot layout:   0:(rows=x, cols=x)  1:(y,y)  2:(y,x)  3:(x,y)
    rows_cnt = np.repeat(np.array([N, M, M, N], np.int32), B)
    cols_cnt = np.repeat(np.array([N, M, N, M], np.int32), B)
    dims_np = np.stack([rows_cnt, cols_cnt], axis=1).astype(np.int32)  # (G, 2)

    def run(x, y, alpha, beta):
        dims = jnp.asarray(dims_np)
        xf = x.astype(jnp.float32)
        yf = y.astype(jnp.float32)

        def pad_rows(pts, n):        # (B, n, D) -> (B, P, Dp)  point-major
            return jnp.pad(pts, ((0, 0), (0, P - n), (0, Dp - D)))

        def pad_cols(pts, n):        # (B, n, D) -> (B, Dp, P)  feature-major
            return jnp.pad(jnp.swapaxes(pts, 1, 2),
                           ((0, 0), (0, Dp - D), (0, P - n)))

        xr, yr = pad_rows(xf, N), pad_rows(yf, M)
        xc, yc = pad_cols(xf, N), pad_cols(yf, M)
        rows = jnp.concatenate([xr, yr, yr, xr], axis=0)        # (G, P, Dp)
        cols = jnp.concatenate([xc, yc, xc, yc], axis=0)        # (G, Dp, P)

        rows_nh = (0.5 * jnp.sum(rows * rows, axis=-1)).reshape(4, B, P)
        cols_nh = (0.5 * jnp.sum(cols * cols, axis=1)).reshape(4, B, P)

        # log-weights padded with -1e30: masking is baked in at construction.
        a_log_p = jnp.pad(log_weights(alpha.astype(jnp.float32)),
                          ((0, 0), (0, P - N)), constant_values=_NEG_BIG)
        b_log_p = jnp.pad(log_weights(beta.astype(jnp.float32)),
                          ((0, 0), (0, P - M)), constant_values=_NEG_BIG)

        a_x, b_y, a_y, b_x = _sinkhorn_loop_fused(
            call, dims, rows, cols, rows_nh, cols_nh,
            a_log_p, b_log_p, eps_s, rho)

        eps = eps_s[-1]
        return sinkhorn_cost(eps, rho,
                             alpha.astype(jnp.float32),
                             beta.astype(jnp.float32),
                             a_x[:, :N], b_y[:, :M], a_y[:, :M], b_x[:, :N])

    return jax.jit(run)


# --------------------------------------------------------------------------
# SamplesLoss
# --------------------------------------------------------------------------

class SamplesLoss:
    """Sinkhorn-divergence loss between sampled measures (balanced, debiased)."""

    def __init__(self, loss='sinkhorn', p=2, blur=0.05, reach=None,
                 diameter=None, scaling=0.5, batchsize=None):
        self.loss = loss
        self.p = p
        self.blur = blur
        self.reach = reach
        self.diameter = diameter
        self.scaling = scaling

    def __call__(self, x, y, geometry=None):
        return self.forward(x, y, geometry)

    def forward(self, x, y, geometry=None):
        alpha, x, beta, y = self.process_args(x, y)
        return self.sinkhorn_tensorized(alpha, x, beta, y, p=self.p,
                                        blur=self.blur, reach=self.reach,
                                        diameter=self.diameter,
                                        scaling=self.scaling, geometry=geometry)

    def process_args(self, x, y):
        return self.generate_weights(x), x, self.generate_weights(y), y

    @staticmethod
    def generate_weights(x):
        if x.ndim == 2:
            N = x.shape[0]
            return jnp.ones((N,), x.dtype) / N
        elif x.ndim == 3:
            B, N, _ = x.shape
            return jnp.ones((B, N), x.dtype) / N
        else:
            raise ValueError("Input samples 'x' and 'y' should be (N,D) or (B,N,D).")

    def sinkhorn_tensorized(self, alpha, x, beta, y, p=2, blur=0.05, reach=None,
                            diameter=None, scaling=0.5, geometry=None):
        # TODO(synk): only the Euclidean |x - y|^2 / 2 cost is supported; the
        # external `distance(geometry=...)` dispatch class is unavailable here.
        if geometry not in (None, 'euclidean'):
            raise NotImplementedError("only 'euclidean' geometry is supported")

        B, N, D = x.shape
        _, M, _ = y.shape
        _, eps, eps_s, rho = scaling_parameters(
            x, y, p, blur, reach, diameter, scaling)

        # One jitted program containing the whole epsilon-scaling loop; cached
        # across forward() calls (and across instances) for identical configs.
        run = _make_run(B, N, M, D, tuple(eps_s), rho)
        return run(x, y, alpha, beta)


# --------------------------------------------------------------------------
# pure-JAX reference
# --------------------------------------------------------------------------

def reference_samples_loss(x, y, p=2, blur=0.05, reach=None, diameter=None,
                           scaling=0.5):
    B, N, _ = x.shape
    _, M, _ = y.shape
    alpha = jnp.ones((B, N), jnp.float32) / N
    beta = jnp.ones((B, M), jnp.float32) / M
    cost = lambda a, b: 0.5 * jnp.sum(
        (a[:, :, None, :] - b[:, None, :, :]) ** 2, axis=-1)

    def softmin_ref(eps, C, wlog):
        return -eps * jax.scipy.special.logsumexp(wlog[:, None, :] - C / eps,
                                                  axis=2)

    C_xx, C_yy, C_xy, C_yx = cost(x, x), cost(y, y), cost(x, y), cost(y, x)
    _, eps, eps_s, rho = scaling_parameters(x, y, p, blur, reach, diameter,
                                            scaling)
    a_x, b_y, a_y, b_x = sinkhorn_loop(
        softmin_ref, log_weights(alpha), log_weights(beta),
        C_xx, C_yy, C_xy, C_yx, eps_s, rho)
    return sinkhorn_cost(eps, rho, alpha, beta, a_x, b_y, a_y, b_x)


# --------------------------------------------------------------------------
# main
# --------------------------------------------------------------------------

if __name__ == "__main__":
    key = jax.random.PRNGKey(0)
    kx, ky = jax.random.split(key)
    B, N, M, D = 2, 16, 12, 3
    x = jax.random.uniform(kx, (B, N, D), dtype=jnp.float32)
    y = jax.random.uniform(ky, (B, M, D), dtype=jnp.float32)

    loss_fn = SamplesLoss(loss='sinkhorn', p=2, blur=0.05, scaling=0.5)
    values = jax.block_until_ready(loss_fn(x, y, geometry='euclidean'))

    ref = jax.block_until_ready(reference_samples_loss(x, y))
    assert values.shape == (B,)
    np.testing.assert_allclose(np.asarray(values), np.asarray(ref),
                               rtol=1e-3, atol=2e-4)
    print("KERNEL_OK")
</pallas_src>

<mosaic_0001>
module attributes {stable_mosaic.version = 11 : i64} {
  func.func @_fused_softmin_kernel(%arg0: i32, %arg1: i32, %arg2: i32, %arg3: memref<8x2xi32, #tpu.memory_space<smem>>, %arg4: memref<1x128x8xf32, #tpu.memory_space<vmem>>, %arg5: memref<1x8x128xf32, #tpu.memory_space<vmem>>, %arg6: memref<1x1x128xf32, #tpu.memory_space<vmem>>, %arg7: memref<1x128x1xf32, #tpu.memory_space<vmem>>, %arg8: memref<128x1xf32, #tpu.memory_space<vmem>>, %arg9: memref<128x1xf32, #tpu.memory_space<vmem>>) attributes {dimension_semantics = [#tpu.dimension_semantics<parallel>, #tpu.dimension_semantics<parallel>, #tpu.dimension_semantics<arbitrary>], iteration_bounds = array<i64: 8, 1, 1>, scalar_prefetch = 0 : i64, scratch_operands = 2 : i64, tpu.core_type = #tpu.core_type<tc>, window_params = [{transform_indices = @transform_0, window_bounds = array<i64: 8, 2>}, {transform_indices = @transform_1, window_bounds = array<i64: 1, 128, 8>}, {transform_indices = @transform_2, window_bounds = array<i64: 1, 8, 128>}, {transform_indices = @transform_3, window_bounds = array<i64: 1, 1, 128>}, {transform_indices = @transform_4, window_bounds = array<i64: 1, 128, 1>}]} {
    %c0_i32 = arith.constant 0 : i32
    %0 = arith.cmpi eq, %arg2, %c0_i32 : i32
    %1 = arith.extui %0 : i1 to i32
    %c0_i32_0 = arith.constant 0 : i32
    %2 = arith.cmpi ne, %1, %c0_i32_0 : i32
    scf.if %2 {
      %cst = arith.constant 0xFF800000 : f32
      %17 = vector.broadcast %cst : f32 to vector<128x1xf32>
      %c0_5 = arith.constant 0 : index
      %c0_6 = arith.constant 0 : index
      %18 = vector.load %arg8[%c0_5, %c0_6] : memref<128x1xf32, #tpu.memory_space<vmem>>, vector<128x1xf32>
      tpu.vector_store %arg8[%c0_5, %c0_6], %17 {strides = array<i32>} : memref<128x1xf32, #tpu.memory_space<vmem>>, vector<128x1xf32>,
      %cst_7 = arith.constant 0.000000e+00 : f32
      %19 = vector.broadcast %cst_7 : f32 to vector<128x1xf32>
      %c0_8 = arith.constant 0 : index
      %c0_9 = arith.constant 0 : index
      %20 = vector.load %arg9[%c0_8, %c0_9] : memref<128x1xf32, #tpu.memory_space<vmem>>, vector<128x1xf32>
      tpu.vector_store %arg9[%c0_8, %c0_9], %19 {strides = array<i32>} : memref<128x1xf32, #tpu.memory_space<vmem>>, vector<128x1xf32>,
    } else {
    }
    %3 = arith.index_cast %arg0 : i32 to index
    %c0 = arith.constant 0 : index
    %4 = memref.load %arg3[%3, %c0] : memref<8x2xi32, #tpu.memory_space<smem>>
    %5 = arith.index_cast %arg0 : i32 to index
    %c1 = arith.constant 1 : index
    %6 = memref.load %arg3[%5, %c1] : memref<8x2xi32, #tpu.memory_space<smem>>
    %c128_i32 = arith.constant 128 : i32
    %7 = arith.muli %arg1, %c128_i32 : i32
    %8 = arith.cmpi slt, %7, %4 : i32
    %c128_i32_1 = arith.constant 128 : i32
    %9 = arith.muli %arg2, %c128_i32_1 : i32
    %10 = arith.cmpi slt, %9, %6 : i32
    %11 = arith.andi %8, %10 : i1
    %12 = arith.extui %11 : i1 to i32
    %c0_i32_2 = arith.constant 0 : i32
    %13 = arith.cmpi ne, %12, %c0_i32_2 : i32
    scf.if %13 {
      %c0_5 = arith.constant 0 : index
      %c0_6 = arith.constant 0 : index
      %c0_7 = arith.constant 0 : index
      %17 = vector.load %arg4[%c0_5, %c0_6, %c0_7] : memref<1x128x8xf32, #tpu.memory_space<vmem>>, vector<1x128x8xf32>
      %18 = vector.shape_cast %17 : vector<1x128x8xf32> to vector<128x8xf32>
      %c0_8 = arith.constant 0 : index
      %c0_9 = arith.constant 0 : index
      %c0_10 = arith.constant 0 : index
      %19 = vector.load %arg5[%c0_8, %c0_9, %c0_10] : memref<1x8x128xf32, #tpu.memory_space<vmem>>, vector<1x8x128xf32>
      %20 = vector.shape_cast %19 : vector<1x8x128xf32> to vector<8x128xf32>
      %c0_11 = arith.constant 0 : index
      %c0_12 = arith.constant 0 : index
      %c0_13 = arith.constant 0 : index
      %21 = vector.load %arg6[%c0_11, %c0_12, %c0_13] : memref<1x1x128xf32, #tpu.memory_space<vmem>>, vector<1x1x128xf32>
      %22 = vector.shape_cast %21 : vector<1x1x128xf32> to vector<1x128xf32>
      %cst = arith.constant dense<0.000000e+00> : vector<128x128xf32>
      %23 = tpu.matmul %18, %20, %cst {dimension_numbers = #tpu.dot_dimension_numbers<[1], [0], [0], [1], [0, 0, 1, 1], [], []>, precision = #tpu.contract_precision<fp32>} : vector<128x8xf32>, vector<8x128xf32>, vector<128x128xf32> -> vector<128x128xf32>
      %24 = vector.broadcast %22 : vector<1x128xf32> to vector<128x128xf32>
      %25 = arith.addf %23, %24 : vector<128x128xf32>
      %c0_14 = arith.constant 0 : index
      %c0_15 = arith.constant 0 : index
      %26 = vector.load %arg8[%c0_14, %c0_15] : memref<128x1xf32, #tpu.memory_space<vmem>>, vector<128x1xf32>
      %cst_16 = arith.constant dense<0xFF800000> : vector<128xf32>
      %27 = vector.multi_reduction <maximumf>, %25, %cst_16 [1] : vector<128x128xf32> to vector<128xf32>
      %28 = vector.shape_cast %27 : vector<128xf32> to vector<128x1xf32>
      %29 = arith.maximumf %26, %28 : vector<128x1xf32>
      %30 = arith.subf %26, %29 : vector<128x1xf32>
      %31 = math.exp %30 : vector<128x1xf32>
      %c0_17 = arith.constant 0 : index
      %c0_18 = arith.constant 0 : index
      %32 = vector.load %arg9[%c0_17, %c0_18] : memref<128x1xf32, #tpu.memory_space<vmem>>, vector<128x1xf32>
      %33 = arith.mulf %31, %32 : vector<128x1xf32>
      %34 = vector.broadcast %29 : vector<128x1xf32> to vector<128x128xf32>
      %35 = arith.subf %25, %34 : vector<128x128xf32>
      %36 = math.exp %35 : vector<128x128xf32>
      %cst_19 = arith.constant dense<0.000000e+00> : vector<128xf32>
      %37 = vector.multi_reduction <add>, %36, %cst_19 [1] : vector<128x128xf32> to vector<128xf32>
      %38 = vector.shape_cast %37 : vector<128xf32> to vector<128x1xf32>
      %39 = arith.addf %33, %38 : vector<128x1xf32>
      %c0_20 = arith.constant 0 : index
      %c0_21 = arith.constant 0 : index
      %40 = vector.load %arg9[%c0_20, %c0_21] : memref<128x1xf32, #tpu.memory_space<vmem>>, vector<128x1xf32>
      tpu.vector_store %arg9[%c0_20, %c0_21], %39 {strides = array<i32>} : memref<128x1xf32, #tpu.memory_space<vmem>>, vector<128x1xf32>,
      %c0_22 = arith.constant 0 : index
      %c0_23 = arith.constant 0 : index
      %41 = vector.load %arg8[%c0_22, %c0_23] : memref<128x1xf32, #tpu.memory_space<vmem>>, vector<128x1xf32>
      tpu.vector_store %arg8[%c0_22, %c0_23], %29 {strides = array<i32>} : memref<128x1xf32, #tpu.memory_space<vmem>>, vector<128x1xf32>,
    } else {
    }
    %c0_i32_3 = arith.constant 0 : i32
    %14 = arith.cmpi eq, %arg2, %c0_i32_3 : i32
    %15 = arith.extui %14 : i1 to i32
    %c0_i32_4 = arith.constant 0 : i32
    %16 = arith.cmpi ne, %15, %c0_i32_4 : i32
    scf.if %16 {
      %c0_5 = arith.constant 0 : index
      %c0_6 = arith.constant 0 : index
      %17 = vector.load %arg8[%c0_5, %c0_6] : memref<128x1xf32, #tpu.memory_space<vmem>>, vector<128x1xf32>
      %c0_7 = arith.constant 0 : index
      %c0_8 = arith.constant 0 : index
      %18 = vector.load %arg9[%c0_7, %c0_8] : memref<128x1xf32, #tpu.memory_space<vmem>>, vector<128x1xf32>
      %19 = math.log %18 : vector<128x1xf32>
      %20 = arith.addf %17, %19 : vector<128x1xf32>
      %cst = arith.constant 0.000000e+00 : f32
      %21 = vector.broadcast %cst : f32 to vector<128x1xf32>
      %22 = arith.select %8, %20, %21 : vector<128x1xf32>
      %c0_9 = arith.constant 0 : index
      %c0_10 = arith.constant 0 : index
      %c0_11 = arith.constant 0 : index
      %23 = vector.load %arg7[%c0_9, %c0_10, %c0_11] : memref<1x128x1xf32, #tpu.memory_space<vmem>>, vector<1x128x1xf32>
      %24 = vector.shape_cast %23 : vector<1x128x1xf32> to vector<128x1xf32>
      %25 = vector.shape_cast %22 : vector<128x1xf32> to vector<1x128x1xf32>
      tpu.vector_store %arg7[%c0_9, %c0_10, %c0_11], %25 {strides = array<i32>} : memref<1x128x1xf32, #tpu.memory_space<vmem>>, vector<1x128x1xf32>,
    } else {
    }
    return
  }
  func.func @transform_0(%arg0: i32, %arg1: i32, %arg2: i32) -> (i32, i32) {
    %c0_i32 = arith.constant 0 : i32
    %c0_i32_0 = arith.constant 0 : i32
    %c0_i32_1 = arith.constant 0 : i32
    return %c0_i32, %c0_i32_0 : i32, i32
  }
  func.func @transform_1(%arg0: i32, %arg1: i32, %arg2: i32) -> (i32, i32, i32) {
    %c0_i32 = arith.constant 0 : i32
    %c0_i32_0 = arith.constant 0 : i32
    return %arg0, %arg1, %c0_i32 : i32, i32, i32
  }
  func.func @transform_2(%arg0: i32, %arg1: i32, %arg2: i32) -> (i32, i32, i32) {
    %c0_i32 = arith.constant 0 : i32
    %c0_i32_0 = arith.constant 0 : i32
    return %arg0, %c0_i32, %arg2 : i32, i32, i32
  }
  func.func @transform_3(%arg0: i32, %arg1: i32, %arg2: i32) -> (i32, i32, i32) {
    %c0_i32 = arith.constant 0 : i32
    %c0_i32_0 = arith.constant 0 : i32
    return %arg0, %c0_i32, %arg2 : i32, i32, i32
  }
  func.func @transform_4(%arg0: i32, %arg1: i32, %arg2: i32) -> (i32, i32, i32) {
    %c0_i32 = arith.constant 0 : i32
    %c0_i32_0 = arith.constant 0 : i32
    return %arg0, %arg1, %c0_i32 : i32, i32, i32
  }
}

</mosaic_0001>

<llo_original>
// kernel: sub.23
$region0: #{sub.23}
  #allocation0 [shape = 's32[1]{0}', space=sflag, size = 0x4, scoped, tag = 'scoped memory for sub.23']
  %s0 = inlined_call_operand.vmem [shape: f32[4,2,128], index: 0, kind: input, shape index: {}]
  %s1 = inlined_call_operand.vmem [shape: f32[4,2,128], index: 1, kind: input, shape index: {}]
  %s2 = inlined_call_operand.vmem [shape: f32[4,2,128], index: 2, kind: output, shape index: {}]
  %v3 = vld [vmem:[%s0] sm:$0x3]
  %v4 = vld [vmem:[%s1] sm:$0x3]
  %5 = xla_tuple %v3, %v4
  %6 = xla_tuple %5
  %v7 = vsub.f32 %v3, %v4
  %8 = xla_tuple %v7
  %9 = vst [vmem:[%s2] sm:$0x3] %v7
  %s10 = scalar_lea.vmem %s0, 2
  %v11 = vld [vmem:[%s10] sm:$0x3]
  %s12 = scalar_lea.vmem %s1, 2
  %v13 = vld [vmem:[%s12] sm:$0x3]
  %14 = xla_tuple %v11, %v13
  %15 = xla_tuple %14
  %v16 = vsub.f32 %v11, %v13
  %17 = xla_tuple %v16
  %s18 = scalar_lea.vmem %s2, 2
  %19 = vst [vmem:[%s18] sm:$0x3] %v16
  %s20 = scalar_lea.vmem %s0, 4
  %v21 = vld [vmem:[%s20] sm:$0x3]
  %s22 = scalar_lea.vmem %s1, 4
  %v23 = vld [vmem:[%s22] sm:$0x3]
  %24 = xla_tuple %v21, %v23
  %25 = xla_tuple %24
  %v26 = vsub.f32 %v21, %v23
  %27 = xla_tuple %v26
  %s28 = scalar_lea.vmem %s2, 4
  %29 = vst [vmem:[%s28] sm:$0x3] %v26
  %s30 = scalar_lea.vmem %s0, 6
  %v31 = vld [vmem:[%s30] sm:$0x3]
  %s32 = scalar_lea.vmem %s1, 6
  %v33 = vld [vmem:[%s32] sm:$0x3]
  %34 = xla_tuple %v31, %v33
  %35 = xla_tuple %34
  %v36 = vsub.f32 %v31, %v33
  %37 = xla_tuple %v36
  %s38 = scalar_lea.vmem %s2, 6
  %39 = vst [vmem:[%s38] sm:$0x3] %v36

// kernel: run.10
$region0: #{run.10}
  #allocation0 [shape = 'u32[]', space=smem, size = 0x4, offset = 0x4, fixed_abs, tag = 'smem constant byte address 0x4 - core index']
  #allocation1 [shape = 'u32[144,128]{1,0:T(1,128)}', space=vmem, size = 0x12000, scoped, tag = 'internal scratch']
  #allocation2 [shape = 'f32[128,1]{1,0:T(8,128)}', space=vmem, size = 0x10000, scoped, tag = 'scratch operand']
  #allocation3 [shape = 'f32[128,1]{1,0:T(8,128)}', space=vmem, size = 0x10000, scoped, tag = 'scratch operand']
  %s0 = inlined_call_operand.vmem [shape: s32[8,2], index: 0, kind: input, shape index: {}]
  %s1 = inlined_call_operand.vmem [shape: f32[8,128,8], index: 1, kind: input, shape index: {}]
  %s2 = inlined_call_operand.vmem [shape: f32[8,8,128], index: 2, kind: input, shape index: {}]
  %s3 = inlined_call_operand.vmem [shape: f32[8,1,128], index: 3, kind: input, shape index: {}]
  %s4 = inlined_call_operand.vmem [shape: f32[8,128,1], index: 4, kind: output, shape index: {}]
  %s5 = sld [smem:[#allocation0]]
  $region65: #{run.10} parent=0
    _
  %s7 = ssub.s32 1, %s5
  %s8 = scalar_select 0, %s7, %s5
  $region1: #{run.10} parent=0
    #allocation4 [shape = 'u8[4096]{0}', space=smem, size = 0x1000, scoped, tag = 'input window, operand 0, single buffered']
    #allocation5 [shape = 's32[2]{0}', space=sflag, size = 0x8, scoped, tag = 'scoped memory for run.10']
    %9 = vsyncpa [#allocation5], 0
    loop: start=0, step=1, limit=10
    $region2: #{run.10} parent=1 // loop_pre_header
      _
    $region3: #{run.10} parent=1 // loop_header
      %s11 = sphi 0, %s15
      %p12 = scmp.ge.s32.totalorder %s11, 10
      %s18 = sphi 0, %s37
      %s19 = sphi 0, %s33
      %s20 = sphi 0, %s29
      %s21 = sphi 0, %s18
      %s22 = sphi 0, %s19
      %s23 = sphi 0, %s20
      %s24 = sphi 0, %s21
      %s25 = sphi 0, %s22
      %s26 = sphi 0, %s23
      %s38 = sphi 0, %s38
      %s40 = sphi 0, %s38
      %s41 = sphi 0, %s40
      %s55 = sphi 0, %s41
      %s63 = sphi 0, %s65
      %s66 = sphi 0, %s63
      %s67 = sphi 0, %s66
      %s83 = sphi 0, %s67
      %s91 = sphi 0, %s93
      %s94 = sphi 0, %s91
      %s95 = sphi 0, %s94
      %s111 = sphi 0, %s95
      %s119 = sphi 0, %s121
      %s122 = sphi 0, %s119
      %s123 = sphi 0, %s122
      %s139 = sphi 0, %s123
      %s147 = sphi 0, %s149
      %s150 = sphi 0, %s147
      %s151 = sphi 0, %s150
      %s167 = sphi 0, %s151
    $region4: #{run.10} parent=1 // loop_header_branch
      %14 = sbr.rel (%p12) target = $region8
    $region5: #{run.10} parent=1 // loop_body
      %s16 = ssub.s32 %s11, 1
      %s17 = ssub.s32 %s11, 2
      %s27 = sadd.s32 1, %s20
      %p28 = scmp.ge.s32.totalorder %s27, 1
      %s29 = scalar_select %p28, 0, %s27
      %s30 = sadd.s32 1, %s19
      %s31 = scalar_select %p28, %s30, %s19
      %p32 = scmp.ge.s32.totalorder %s31, 1
      %s33 = scalar_select %p32, 0, %s31
      %s34 = sadd.s32 1, %s18
      %s35 = scalar_select %p32, %s34, %s18
      %p36 = scmp.ge.s32.totalorder %s35, 8
      %s37 = scalar_select %p36, 0, %s35
      %s39 = sadd.s32 %s38, 1
      %p42 = scmp.eq.s32.totalorder %s11, 7
      %p43 = scmp.ne.s32.totalorder %s38, %s40
      %p44 = scmp.eq.s32.totalorder %s11, 0
      %p45 = por %p43, %p44
      %p46 = scmp.ne.s32.totalorder %s38, %s40
      %p47 = scmp.eq.s32.totalorder %s16, 7
      %p48 = por %p46, %p47
      %p49 = scmp.ne.s32.totalorder %s40, %s41
      %p50 = scmp.eq.s32.totalorder %s16, 0
      %p51 = por %p49, %p50
      %p52 = scmp.ne.s32.totalorder %s40, %s41
      %p53 = scmp.eq.s32.totalorder %s17, 7
      %p54 = por %p52, %p53
      %p56 = scmp.ne.s32.totalorder %s41, %s55
      %p57 = scmp.eq.s32.totalorder %s17, 0
      %p58 = por %p56, %p57
      %s59 = ssub.s32 %s18, %s37
      %s60 = ssub.s32 %s19, %s33
      %s61 = sor.u32 %s59, %s60
      %p62 = scmp.eq.s32.totalorder %s61, 0
      %s64 = sadd.s32 %s63, 1
      %s65 = scalar_select %p62, %s63, %s64
      %p68 = pneg %p62
      %p69 = scmp.eq.s32.totalorder %s11, 7
      %p70 = por %p68, %p69
      %p71 = scmp.ne.s32.totalorder %s63, %s66
      %p72 = scmp.eq.s32.totalorder %s11, 0
      %p73 = por %p71, %p72
      %p74 = scmp.ne.s32.totalorder %s63, %s66
      %p75 = scmp.eq.s32.totalorder %s16, 7
      %p76 = por %p74, %p75
      %p77 = scmp.ne.s32.totalorder %s66, %s67
      %p78 = scmp.eq.s32.totalorder %s16, 0
      %p79 = por %p77, %p78
      %p80 = scmp.ne.s32.totalorder %s66, %s67
      %p81 = scmp.eq.s32.totalorder %s17, 7
      %p82 = por %p80, %p81
      %p84 = scmp.ne.s32.totalorder %s67, %s83
      %p85 = scmp.eq.s32.totalorder %s17, 0
      %p86 = por %p84, %p85
      %s87 = ssub.s32 %s18, %s37
      %s88 = ssub.s32 %s20, %s29
      %s89 = sor.u32 %s87, %s88
      %p90 = scmp.eq.s32.totalorder %s89, 0
      %s92 = sadd.s32 %s91, 1
      %s93 = scalar_select %p90, %s91, %s92
      %p96 = pneg %p90
      %p97 = scmp.eq.s32.totalorder %s11, 7
      %p98 = por %p96, %p97
      %p99 = scmp.ne.s32.totalorder %s91, %s94
      %p100 = scmp.eq.s32.totalorder %s11, 0
      %p101 = por %p99, %p100
      %p102 = scmp.ne.s32.totalorder %s91, %s94
      %p103 = scmp.eq.s32.totalorder %s16, 7
      %p104 = por %p102, %p103
      %p105 = scmp.ne.s32.totalorder %s94, %s95
      %p106 = scmp.eq.s32.totalorder %s16, 0
      %p107 = por %p105, %p106
      %p108 = scmp.ne.s32.totalorder %s94, %s95
      %p109 = scmp.eq.s32.totalorder %s17, 7
      %p110 = por %p108, %p109
      %p112 = scmp.ne.s32.totalorder %s95, %s111
      %p113 = scmp.eq.s32.totalorder %s17, 0
      %p114 = por %p112, %p113
      %s115 = ssub.s32 %s18, %s37
      %s116 = ssub.s32 %s20, %s29
      %s117 = sor.u32 %s115, %s116
      %p118 = scmp.eq.s32.totalorder %s117, 0
      %s120 = sadd.s32 %s119, 1
      %s121 = scalar_select %p118, %s119, %s120
      %p124 = pneg %p118
      %p125 = scmp.eq.s32.totalorder %s11, 7
      %p126 = por %p124, %p125
      %p127 = scmp.ne.s32.totalorder %s119, %s122
      %p128 = scmp.eq.s32.totalorder %s11, 0
      %p129 = por %p127, %p128
      %p130 = scmp.ne.s32.totalorder %s119, %s122
      %p131 = scmp.eq.s32.totalorder %s16, 7
      %p132 = por %p130, %p131
      %p133 = scmp.ne.s32.totalorder %s122, %s123
      %p134 = scmp.eq.s32.totalorder %s16, 0
      %p135 = por %p133, %p134
      %p136 = scmp.ne.s32.totalorder %s122, %s123
      %p137 = scmp.eq.s32.totalorder %s17, 7
      %p138 = por %p136, %p137
      %p140 = scmp.ne.s32.totalorder %s123, %s139
      %p141 = scmp.eq.s32.totalorder %s17, 0
      %p142 = por %p140, %p141
      %s143 = ssub.s32 %s18, %s37
      %s144 = ssub.s32 %s19, %s33
      %s145 = sor.u32 %s143, %s144
      %p146 = scmp.eq.s32.totalorder %s145, 0
      %s148 = sadd.s32 %s147, 1
      %s149 = scalar_select %p146, %s147, %s148
      %p152 = pneg %p146
      %p153 = scmp.eq.s32.totalorder %s11, 7
      %p154 = por %p152, %p153
      %p155 = scmp.ne.s32.totalorder %s147, %s150
      %p156 = scmp.eq.s32.totalorder %s11, 0
      %p157 = por %p155, %p156
      %p158 = scmp.ne.s32.totalorder %s147, %s150
      %p159 = scmp.eq.s32.totalorder %s16, 7
      %p160 = por %p158, %p159
      %p161 = scmp.ne.s32.totalorder %s150, %s151
      %p162 = scmp.eq.s32.totalorder %s16, 0
      %p163 = por %p161, %p162
      %p164 = scmp.ne.s32.totalorder %s150, %s151
      %p165 = scmp.eq.s32.totalorder %s17, 7
      %p166 = por %p164, %p165
      %p168 = scmp.ne.s32.totalorder %s151, %s167
      %p169 = scmp.eq.s32.totalorder %s17, 0
      %p170 = por %p168, %p169
      %p171 = scmp.le.s32.totalorder 1, %s11
      %p172 = scmp.lt.s32.totalorder %s11, 9
      %p173 = pnand %p171, %p172
      %p174 = pneg %p173
      // Predicated region
      $region9: #{run.10} parent=5 // pred_check
        _
      $region10: #{run.10} parent=5 // pred_check_branch
        %176 = sbr.rel (%p173) target = $region12
      $region11: #{run.10} parent=5 // pred_region
        %s177 = ssub.s32 %s11, 1
        // Predicated region
        $region13: #{run.10} parent=11 // pred_check
          %p178 = pneg %p51
        $region14: #{run.10} parent=11 // pred_check_branch
          %180 = sbr.rel (%p178) target = $region16
        $region15: #{run.10} parent=11 // pred_region
          %s182 = ssub.s32 128, 128
          %183 = vsyncadd [#allocation5], %s182
          %s185 = sshll.u32 %s0, 4
          %s186 = int_to_ptr.vmem [resolvable:$true] %s185
          %188 = dma.vmem_to_smem %s186, 128, [#allocation4], [#allocation5]
        $region16: #{run.10} parent=11 // pred_fallthru
          _
      $region12: #{run.10} parent=5 // pred_fallthru
        _
      %p189 = scmp.lt.s32.totalorder %s11, 8
      // Predicated region
      $region17: #{run.10} parent=5 // pred_check
        %p190 = pneg %p189
      $region18: #{run.10} parent=5 // pred_check_branch
        %192 = sbr.rel (%p190) target = $region20
      $region19: #{run.10} parent=5 // pred_region
        // Predicated region
        $region21: #{run.10} parent=19 // pred_check
          %p193 = pneg %p73
        $region22: #{run.10} parent=19 // pred_check_branch
          %195 = sbr.rel (%p193) target = $region24
        $region23: #{run.10} parent=19 // pred_region
          %s196 = smul.u32 16, %s19
          %p197 = scmp.lt.s32.totalorder %s18, 7
          %s198 = scalar_select %p197, %s18, 7
          %p199 = scmp.lt.s32.totalorder %s196, 15
          %s200 = scalar_select %p199, %s196, 15
          %s201 = smul.addr %s198, 16
          %s202 = sadd.s32 %s200, %s201
          %s203 = smul.addr %s202, 8
          %s204 = scalar_lea.vmem %s1, %s203
          %s205 = smul.u32 16, %s19
        $region24: #{run.10} parent=19 // pred_fallthru
          _
        // Predicated region
        $region25: #{run.10} parent=19 // pred_check
          %p206 = pneg %p101
        $region26: #{run.10} parent=19 // pred_check_branch
          %208 = sbr.rel (%p206) target = $region28
        $region27: #{run.10} parent=19 // pred_region
          %p209 = scmp.lt.s32.totalorder %s18, 7
          %s210 = scalar_select %p209, %s18, 7
          %p211 = scmp.lt.s32.totalorder %s20, 0
          %s212 = scalar_select %p211, %s20, 0
          %s213 = sadd.s32 %s212, %s210
          %s214 = smul.addr %s213, 8
          %s215 = scalar_lea.vmem %s2, %s214
        $region28: #{run.10} parent=19 // pred_fallthru
          _
        // Predicated region
        $region29: #{run.10} parent=19 // pred_check
          %p216 = pneg %p129
        $region30: #{run.10} parent=19 // pred_check_branch
          %218 = sbr.rel (%p216) target = $region32
        $region31: #{run.10} parent=19 // pred_region
          %p219 = scmp.lt.s32.totalorder %s18, 7
          %s220 = scalar_select %p219, %s18, 7
          %p221 = scmp.lt.s32.totalorder %s20, 0
          %s222 = scalar_select %p221, %s20, 0
          %s223 = sadd.s32 %s222, %s220
          %s224 = scalar_lea.vmem %s3, %s223
        $region32: #{run.10} parent=19 // pred_fallthru
          _
      $region20: #{run.10} parent=5 // pred_fallthru
        _
      %p225 = scmp.le.s32.totalorder 1, %s11
      %p226 = scmp.lt.s32.totalorder %s11, 9
      %p227 = pnand %p225, %p226
      %p228 = pneg %p227
      // Predicated region
      $region33: #{run.10} parent=5 // pred_check
        _
      $region34: #{run.10} parent=5 // pred_check_branch
        %230 = sbr.rel (%p227) target = $region36
      $region35: #{run.10} parent=5 // pred_region
        %s231 = ssub.s32 %s11, 1
        // Predicated region
        $region37: #{run.10} parent=35 // pred_check
          %p232 = pneg %p51
        $region38: #{run.10} parent=35 // pred_check_branch
          %234 = sbr.rel (%p232) target = $region40
        $region39: #{run.10} parent=35 // pred_region
          %235 = dma.done [#allocation5], 128
        $region40: #{run.10} parent=35 // pred_fallthru
          _
        %236 = sfence
        %p237 = pneg %p51
        %p238 = pneg %p48
        %s239 = smul.u32 16, %s22
        %p240 = scmp.lt.s32.totalorder %s21, 7
        %s241 = scalar_select %p240, %s21, 7
        %p242 = scmp.lt.s32.totalorder %s239, 15
        %s243 = scalar_select %p242, %s239, 15
        %s244 = smul.addr %s241, 16
        %s245 = sadd.s32 %s243, %s244
        %s246 = smul.addr %s245, 8
        %s247 = scalar_lea.vmem %s1, %s246
        %p248 = pneg %p79
        %p249 = pneg %p76
        %p250 = scmp.lt.s32.totalorder %s21, 7
        %s251 = scalar_select %p250, %s21, 7
        %p252 = scmp.lt.s32.totalorder %s23, 0
        %s253 = scalar_select %p252, %s23, 0
        %s254 = sadd.s32 %s253, %s251
        %s255 = smul.addr %s254, 8
        %s256 = scalar_lea.vmem %s2, %s255
        %p257 = pneg %p107
        %p258 = pneg %p104
        %p259 = scmp.lt.s32.totalorder %s21, 7
        %s260 = scalar_select %p259, %s21, 7
        %p261 = scmp.lt.s32.totalorder %s23, 0
        %s262 = scalar_select %p261, %s23, 0
        %s263 = sadd.s32 %s262, %s260
        %s264 = scalar_lea.vmem %s3, %s263
        %p265 = pneg %p135
        %p266 = pneg %p132
        %p267 = pneg %p163
        %p268 = pneg %p160
        %s269 = smul.u32 16, %s22
        %p270 = scmp.lt.s32.totalorder %s21, 7
        %s271 = scalar_select %p270, %s21, 7
        %p272 = scmp.lt.s32.totalorder %s269, 15
        %s273 = scalar_select %p272, %s269, 15
        %s274 = smul.addr %s271, 16
        %s275 = sadd.s32 %s273, %s274
        %s276 = smul.addr %s275, 8
        %s277 = scalar_lea.vmem %s4, %s276
        %s278 = smul.u32 16, %s22
        %p279 = scmp.lt.s32.totalorder %s21, 7
        %s280 = scalar_select %p279, %s21, 7
        %p281 = scmp.lt.s32.totalorder %s278, 15
        %s282 = scalar_select %p281, %s278, 15
        %s283 = smul.addr %s280, 16
        %s284 = sadd.s32 %s282, %s283
        %s285 = smul.addr %s284, 8
        %s286 = scalar_lea.vmem %s1, %s285
        %s287 = smul.u32 16, %s22
        %p288 = scmp.lt.s32.totalorder %s21, 7
        %s289 = scalar_select %p288, %s21, 7
        %p290 = scmp.lt.s32.totalorder %s23, 0
        %s291 = scalar_select %p290, %s23, 0
        %s292 = sadd.s32 %s291, %s289
        %s293 = smul.addr %s292, 8
        %s294 = scalar_lea.vmem %s2, %s293
        %p295 = scmp.lt.s32.totalorder %s21, 7
        %s296 = scalar_select %p295, %s21, 7
        %p297 = scmp.lt.s32.totalorder %s23, 0
        %s298 = scalar_select %p297, %s23, 0
        %s299 = sadd.s32 %s298, %s296
        %s300 = scalar_lea.vmem %s3, %s299
        %s301 = smul.u32 16, %s22
        %p302 = scmp.lt.s32.totalorder %s21, 7
        %s303 = scalar_select %p302, %s21, 7
        %p304 = scmp.lt.s32.totalorder %s301, 15
        %s305 = scalar_select %p304, %s301, 15
        %s306 = smul.addr %s303, 16
        %s307 = sadd.s32 %s305, %s306
        %s308 = smul.addr %s307, 8
        %s309 = scalar_lea.vmem %s4, %s308
        %s310 = smul.u32 16, %s22
        %p311 = scmp.eq.s32.totalorder %s23, 0
        // Predicated region
        $region41: #{run.10} parent=35 // pred_check
          %p312 = pneg %p311
        $region42: #{run.10} parent=35 // pred_check_branch
          %314 = sbr.rel (%p312) target = $region44
        $region43: #{run.10} parent=35 // pred_region
          %vm315 = vcmask 7168
          %316 = vst.msk [vmem:[#allocation2] sm:$0xff] %vm315, -inf
          %317 = vst.msk [vmem:[#allocation2 + $0x8] sm:$0xff] %vm315, -inf
          %318 = vst.msk [vmem:[#allocation2 + $0x10] sm:$0xff] %vm315, -inf
          %319 = vst.msk [vmem:[#allocation2 + $0x18] sm:$0xff] %vm315, -inf
          %320 = vst.msk [vmem:[#allocation2 + $0x20] sm:$0xff] %vm315, -inf
          %321 = vst.msk [vmem:[#allocation2 + $0x28] sm:$0xff] %vm315, -inf
          %322 = vst.msk [vmem:[#allocation2 + $0x30] sm:$0xff] %vm315, -inf
          %323 = vst.msk [vmem:[#allocation2 + $0x38] sm:$0xff] %vm315, -inf
          %324 = vst.msk [vmem:[#allocation2 + $0x40] sm:$0xff] %vm315, -inf
          %325 = vst.msk [vmem:[#allocation2 + $0x48] sm:$0xff] %vm315, -inf
          %326 = vst.msk [vmem:[#allocation2 + $0x50] sm:$0xff] %vm315, -inf
          %327 = vst.msk [vmem:[#allocation2 + $0x58] sm:$0xff] %vm315, -inf
          %328 = vst.msk [vmem:[#allocation2 + $0x60] sm:$0xff] %vm315, -inf
          %329 = vst.msk [vmem:[#allocation2 + $0x68] sm:$0xff] %vm315, -inf
          %330 = vst.msk [vmem:[#allocation2 + $0x70] sm:$0xff] %vm315, -inf
          %331 = vst.msk [vmem:[#allocation2 + $0x78] sm:$0xff] %vm315, -inf
          %332 = vst.msk [vmem:[#allocation3] sm:$0xff] %vm315, 0.0
          %333 = vst.msk [vmem:[#allocation3 + $0x8] sm:$0xff] %vm315, 0.0
          %334 = vst.msk [vmem:[#allocation3 + $0x10] sm:$0xff] %vm315, 0.0
          %335 = vst.msk [vmem:[#allocation3 + $0x18] sm:$0xff] %vm315, 0.0
          %336 = vst.msk [vmem:[#allocation3 + $0x20] sm:$0xff] %vm315, 0.0
          %337 = vst.msk [vmem:[#allocation3 + $0x28] sm:$0xff] %vm315, 0.0
          %338 = vst.msk [vmem:[#allocation3 + $0x30] sm:$0xff] %vm315, 0.0
          %339 = vst.msk [vmem:[#allocation3 + $0x38] sm:$0xff] %vm315, 0.0
          %340 = vst.msk [vmem:[#allocation3 + $0x40] sm:$0xff] %vm315, 0.0
          %341 = vst.msk [vmem:[#allocation3 + $0x48] sm:$0xff] %vm315, 0.0
          %342 = vst.msk [vmem:[#allocation3 + $0x50] sm:$0xff] %vm315, 0.0
          %343 = vst.msk [vmem:[#allocation3 + $0x58] sm:$0xff] %vm315, 0.0
          %344 = vst.msk [vmem:[#allocation3 + $0x60] sm:$0xff] %vm315, 0.0
          %345 = vst.msk [vmem:[#allocation3 + $0x68] sm:$0xff] %vm315, 0.0
          %346 = vst.msk [vmem:[#allocation3 + $0x70] sm:$0xff] %vm315, 0.0
          %347 = vst.msk [vmem:[#allocation3 + $0x78] sm:$0xff] %vm315, 0.0
        $region44: #{run.10} parent=35 // pred_fallthru
          _
        %s348 = smul.u32 %s21, 128
        %s349 = sld [smem:[#allocation4 + %s348]]
        %s350 = sadd.s32 %s348, 1
        %s351 = sld [smem:[#allocation4 + %s350]]
        %s352 = smul.u32 %s22, 128
        %p353 = scmp.lt.s32.totalorder %s352, %s349
        %s354 = smul.u32 %s23, 128
        %p355 = scmp.lt.s32.totalorder %s354, %s351
        %p356 = pnand %p353, %p355
        %p357 = pneg %p356
        // Predicated region
        $region45: #{run.10} parent=35 // pred_check
          _
        $region46: #{run.10} parent=35 // pred_check_branch
          %359 = sbr.rel (%p356) target = $region48
        $region47: #{run.10} parent=35 // pred_region
          %v360 = vld [vmem:[%s286] sm:$0xff]
          %v361 = vld [vmem:[%s286 + $0x8] sm:$0xff]
          %v362 = vld [vmem:[%s286 + $0x10] sm:$0xff]
          %v363 = vld [vmem:[%s286 + $0x18] sm:$0xff]
          %v364 = vld [vmem:[%s286 + $0x20] sm:$0xff]
          %v365 = vld [vmem:[%s286 + $0x28] sm:$0xff]
          %v366 = vld [vmem:[%s286 + $0x30] sm:$0xff]
          %v367 = vld [vmem:[%s286 + $0x38] sm:$0xff]
          %v368 = vld [vmem:[%s286 + $0x40] sm:$0xff]
          %v369 = vld [vmem:[%s286 + $0x48] sm:$0xff]
          %v370 = vld [vmem:[%s286 + $0x50] sm:$0xff]
          %v371 = vld [vmem:[%s286 + $0x58] sm:$0xff]
          %v372 = vld [vmem:[%s286 + $0x60] sm:$0xff]
          %v373 = vld [vmem:[%s286 + $0x68] sm:$0xff]
          %v374 = vld [vmem:[%s286 + $0x70] sm:$0xff]
          %v375 = vld [vmem:[%s286 + $0x78] sm:$0xff]
          %v376 = vld [vmem:[%s294] sm:$0xff]
          %v377 = vld [vmem:[%s300] sm:$0x1]
          %v379 = vlaneseq
          %v380 = vshrl.u32 %v379, 7
          %v381 = vsub.s32 0, %v380
          %v382 = vrot.slane %v377, %v381
          %vm384 = vcmask 64512
          %v386 = vsel %vm384, %v360, 0
          %v389 = vsel %vm384, %v361, 0
          %v392 = vsel %vm384, %v362, 0
          %v395 = vsel %vm384, %v363, 0
          %v398 = vsel %vm384, %v364, 0
          %v401 = vsel %vm384, %v365, 0
          %v404 = vsel %vm384, %v366, 0
          %v407 = vsel %vm384, %v367, 0
          %v410 = vsel %vm384, %v368, 0
          %v413 = vsel %vm384, %v369, 0
          %v416 = vsel %vm384, %v370, 0
          %v419 = vsel %vm384, %v371, 0
          %v422 = vsel %vm384, %v372, 0
          %v425 = vsel %vm384, %v373, 0
          %v428 = vsel %vm384, %v374, 0
          %v431 = vsel %vm384, %v375, 0
          %433 = vmatprep.subr.mxu0 0.0
          %v434 = vand.u32 %v376, 4294901760
          %435 = vmatpush1.msra.mxu0 %v434
          %436 = vmatprep.subr.mxu0 0.0
          %437 = vmatpush1.msra.mxu0 0.0
          %438 = vmatprep.subr.mxu0 0.0
          %439 = vmatpush1.msra.mxu0 0.0
          %440 = vmatprep.subr.mxu0 0.0
          %441 = vmatpush1.msra.mxu0 0.0
          %442 = vmatprep.subr.mxu0 0.0
          %443 = vmatpush1.msra.mxu0 0.0
          %444 = vmatprep.subr.mxu0 0.0
          %445 = vmatpush1.msra.mxu0 0.0
          %446 = vmatprep.subr.mxu0 0.0
          %447 = vmatpush1.msra.mxu0 0.0
          %448 = vmatprep.subr.mxu0 0.0
          %449 = vmatpush1.msra.mxu0 0.0
          %450 = vmatprep.subr.mxu0 0.0
          %451 = vmatpush1.msra.mxu0 0.0
          %452 = vmatprep.subr.mxu0 0.0
          %453 = vmatpush1.msra.mxu0 0.0
          %454 = vmatprep.subr.mxu0 0.0
          %455 = vmatpush1.msra.mxu0 0.0
          %456 = vmatprep.subr.mxu0 0.0
          %457 = vmatpush1.msra.mxu0 0.0
          %458 = vmatprep.subr.mxu0 0.0
          %459 = vmatpush1.msra.mxu0 0.0
          %460 = vmatprep.subr.mxu0 0.0
          %461 = vmatpush1.msra.mxu0 0.0
          %462 = vmatprep.subr.mxu0 0.0
          %463 = vmatpush1.msra.mxu0 0.0
          %464 = vmatprep.subr.mxu0 0.0
          %465 = vmatpush1.msra.mxu0 0.0
          %466 = vmatprep.subr.mxu0 0.0
          %467 = vmatpush1.msra.mxu0 0.0
          %468 = vmatprep.subr.mxu0 0.0
          %469 = vmatpush1.msra.mxu0 0.0
          %470 = vmatprep.subr.mxu0 0.0
          %471 = vmatpush1.msra.mxu0 0.0
          %472 = vmatprep.subr.mxu0 0.0
          %473 = vmatpush1.msra.mxu0 0.0
          %474 = vmatprep.subr.mxu0 0.0
          %475 = vmatpush1.msra.mxu0 0.0
          %476 = vmatprep.subr.mxu0 0.0
          %477 = vmatpush1.msra.mxu0 0.0
          %478 = vmatprep.subr.mxu0 0.0
          %479 = vmatpush1.msra.mxu0 0.0
          %480 = vmatprep.subr.mxu0 0.0
          %481 = vmatpush1.msra.mxu0 0.0
          %482 = vmatprep.subr.mxu0 0.0
          %483 = vmatpush1.msra.mxu0 0.0
          %484 = vmatprep.subr.mxu0 0.0
          %485 = vmatpush1.msra.mxu0 0.0
          %486 = vmatprep.subr.mxu0 0.0
          %487 = vmatpush1.msra.mxu0 0.0
          %488 = vmatprep.subr.mxu0 0.0
          %489 = vmatpush1.msra.mxu0 0.0
          %490 = vmatprep.subr.mxu0 0.0
          %491 = vmatpush1.msra.mxu0 0.0
          %492 = vmatprep.subr.mxu0 0.0
          %493 = vmatpush1.msra.mxu0 0.0
          %494 = vmatprep.subr.mxu0 0.0
          %495 = vmatpush1.msra.mxu0 0.0
          %496 = vmatprep.subr.mxu0 0.0
          %497 = vmatpush1.msra.mxu0 0.0
          %498 = vmatprep.mubr.f32.mxu0 0.0
          %v499 = vand.u32 %v386, 4294901760
          %v500 = vsub.f32 %v386, %v499
          %v501 = vand.u32 %v500, 4294901760
          %v502 = vsub.f32 %v500, %v501
          %v503 = vand.u32 %v502, 4294901760
          %504 = vmatmul.mubr.f32.gmra.mrb[0].mxu0 %v503
          %v505 = vpop.f32.mrb[0].mxu0
          %v506 = vadd.f32 %v382, %v505
          %v507 = vpop.f32.mrb[0].mxu0
          %508 = vmatprep.mubr.f32.mxu0 0.0
          %v509 = vand.u32 %v389, 4294901760
          %v510 = vsub.f32 %v389, %v509
          %v511 = vand.u32 %v510, 4294901760
          %v512 = vsub.f32 %v510, %v511
          %v513 = vand.u32 %v512, 4294901760
          %514 = vmatmul.mubr.f32.gmra.mrb[0].mxu0 %v513
          %v515 = vpop.f32.mrb[0].mxu0
          %v516 = vadd.f32 %v382, %v515
          %v517 = vpop.f32.mrb[0].mxu0
          %518 = vmatprep.mubr.f32.mxu0 0.0
          %v519 = vand.u32 %v392, 4294901760
          %v520 = vsub.f32 %v392, %v519
          %v521 = vand.u32 %v520, 4294901760
          %v522 = vsub.f32 %v520, %v521
          %v523 = vand.u32 %v522, 4294901760
          %524 = vmatmul.mubr.f32.gmra.mrb[0].mxu0 %v523
          %v525 = vpop.f32.mrb[0].mxu0
          %v526 = vadd.f32 %v382, %v525
          %v527 = vpop.f32.mrb[0].mxu0
          %528 = vmatprep.mubr.f32.mxu0 0.0
          %v529 = vand.u32 %v395, 4294901760
          %v530 = vsub.f32 %v395, %v529
          %v531 = vand.u32 %v530, 4294901760
          %v532 = vsub.f32 %v530, %v531
          %v533 = vand.u32 %v532, 4294901760
          %534 = vmatmul.mubr.f32.gmra.mrb[0].mxu0 %v533
          %v535 = vpop.f32.mrb[0].mxu0
          %v536 = vadd.f32 %v382, %v535
          %v537 = vpop.f32.mrb[0].mxu0
          %538 = vmatprep.mubr.f32.mxu0 0.0
          %v539 = vand.u32 %v398, 4294901760
          %v540 = vsub.f32 %v398, %v539
          %v541 = vand.u32 %v540, 4294901760
          %v542 = vsub.f32 %v540, %v541
          %v543 = vand.u32 %v542, 4294901760
          %544 = vmatmul.mubr.f32.gmra.mrb[0].mxu0 %v543
          %v545 = vpop.f32.mrb[0].mxu0
          %v546 = vadd.f32 %v382, %v545
          %v547 = vpop.f32.mrb[0].mxu0
          %548 = vmatprep.mubr.f32.mxu0 0.0
          %v549 = vand.u32 %v401, 4294901760
          %v550 = vsub.f32 %v401, %v549
          %v551 = vand.u32 %v550, 4294901760
          %v552 = vsub.f32 %v550, %v551
          %v553 = vand.u32 %v552, 4294901760
          %554 = vmatmul.mubr.f32.gmra.mrb[0].mxu0 %v553
          %v555 = vpop.f32.mrb[0].mxu0
          %v556 = vadd.f32 %v382, %v555
          %v557 = vpop.f32.mrb[0].mxu0
          %558 = vmatprep.mubr.f32.mxu0 0.0
          %v559 = vand.u32 %v404, 4294901760
          %v560 = vsub.f32 %v404, %v559
          %v561 = vand.u32 %v560, 4294901760
          %v562 = vsub.f32 %v560, %v561
          %v563 = vand.u32 %v562, 4294901760
          %564 = vmatmul.mubr.f32.gmra.mrb[0].mxu0 %v563
          %v565 = vpop.f32.mrb[0].mxu0
          %v566 = vadd.f32 %v382, %v565
          %v567 = vpop.f32.mrb[0].mxu0
          %568 = vmatprep.mubr.f32.mxu0 0.0
          %v569 = vand.u32 %v407, 4294901760
          %v570 = vsub.f32 %v407, %v569
          %v571 = vand.u32 %v570, 4294901760
          %v572 = vsub.f32 %v570, %v571
          %v573 = vand.u32 %v572, 4294901760
          %574 = vmatmul.mubr.f32.gmra.mrb[0].mxu0 %v573
          %v575 = vpop.f32.mrb[0].mxu0
          %v576 = vadd.f32 %v382, %v575
          %v577 = vpop.f32.mrb[0].mxu0
          %578 = vmatprep.mubr.f32.mxu0 0.0
          %v579 = vand.u32 %v410, 4294901760
          %v580 = vsub.f32 %v410, %v579
          %v581 = vand.u32 %v580, 4294901760
          %v582 = vsub.f32 %v580, %v581
          %v583 = vand.u32 %v582, 4294901760
          %584 = vmatmul.mubr.f32.gmra.mrb[0].mxu0 %v583
          %v585 = vpop.f32.mrb[0].mxu0
          %v586 = vadd.f32 %v382, %v585
          %v587 = vpop.f32.mrb[0].mxu0
          %588 = vmatprep.mubr.f32.mxu0 0.0
          %v589 = vand.u32 %v413, 4294901760
          %v590 = vsub.f32 %v413, %v589
          %v591 = vand.u32 %v590, 4294901760
          %v592 = vsub.f32 %v590, %v591
          %v593 = vand.u32 %v592, 4294901760
          %594 = vmatmul.mubr.f32.gmra.mrb[0].mxu0 %v593
          %v595 = vpop.f32.mrb[0].mxu0
          %v596 = vadd.f32 %v382, %v595
          %v597 = vpop.f32.mrb[0].mxu0
          %598 = vmatprep.mubr.f32.mxu0 0.0
          %v599 = vand.u32 %v416, 4294901760
          %v600 = vsub.f32 %v416, %v599
          %v601 = vand.u32 %v600, 4294901760
          %v602 = vsub.f32 %v600, %v601
          %v603 = vand.u32 %v602, 4294901760
          %604 = vmatmul.mubr.f32.gmra.mrb[0].mxu0 %v603
          %v605 = vpop.f32.mrb[0].mxu0
          %v606 = vadd.f32 %v382, %v605
          %v607 = vpop.f32.mrb[0].mxu0
          %608 = vmatprep.mubr.f32.mxu0 0.0
          %v609 = vand.u32 %v419, 4294901760
          %v610 = vsub.f32 %v419, %v609
          %v611 = vand.u32 %v610, 4294901760
          %v612 = vsub.f32 %v610, %v611
          %v613 = vand.u32 %v612, 4294901760
          %614 = vmatmul.mubr.f32.gmra.mrb[0].mxu0 %v613
          %v615 = vpop.f32.mrb[0].mxu0
          %v616 = vadd.f32 %v382, %v615
          %v617 = vpop.f32.mrb[0].mxu0
          %618 = vmatprep.mubr.f32.mxu0 0.0
          %v619 = vand.u32 %v422, 4294901760
          %v620 = vsub.f32 %v422, %v619
          %v621 = vand.u32 %v620, 4294901760
          %v622 = vsub.f32 %v620, %v621
          %v623 = vand.u32 %v622, 4294901760
          %624 = vmatmul.mubr.f32.gmra.mrb[0].mxu0 %v623
          %v625 = vpop.f32.mrb[0].mxu0
          %v626 = vadd.f32 %v382, %v625
          %v627 = vpop.f32.mrb[0].mxu0
          %628 = vmatprep.mubr.f32.mxu0 0.0
          %v629 = vand.u32 %v425, 4294901760
          %v630 = vsub.f32 %v425, %v629
          %v631 = vand.u32 %v630, 4294901760
          %v632 = vsub.f32 %v630, %v631
          %v633 = vand.u32 %v632, 4294901760
          %634 = vmatmul.mubr.f32.gmra.mrb[0].mxu0 %v633
          %v635 = vpop.f32.mrb[0].mxu0
          %v636 = vadd.f32 %v382, %v635
          %v637 = vpop.f32.mrb[0].mxu0
          %638 = vmatprep.mubr.f32.mxu0 0.0
          %v639 = vand.u32 %v428, 4294901760
          %v640 = vsub.f32 %v428, %v639
          %v641 = vand.u32 %v640, 4294901760
          %v642 = vsub.f32 %v640, %v641
          %v643 = vand.u32 %v642, 4294901760
          %644 = vmatmul.mubr.f32.gmra.mrb[0].mxu0 %v643
          %v645 = vpop.f32.mrb[0].mxu0
          %v646 = vadd.f32 %v382, %v645
          %v647 = vpop.f32.mrb[0].mxu0
          %648 = vmatprep.mubr.f32.mxu0 0.0
          %v649 = vand.u32 %v431, 4294901760
          %v650 = vsub.f32 %v431, %v649
          %v651 = vand.u32 %v650, 4294901760
          %v652 = vsub.f32 %v650, %v651
          %v653 = vand.u32 %v652, 4294901760
          %654 = vmatmul.mubr.f32.gmra.mrb[0].mxu0 %v653
          %v655 = vpop.f32.mrb[0].mxu0
          %v656 = vadd.f32 %v382, %v655
          %v657 = vpop.f32.mrb[0].mxu0
          %658 = vdwg.mxu0
          %659 = vmatprep.subr.mxu0 0.0
          %v660 = vand.u32 %v376, 4294901760
          %v661 = vsub.f32 %v376, %v660
          %v662 = vand.u32 %v661, 4294901760
          %v663 = vsub.f32 %v661, %v662
          %v664 = vand.u32 %v663, 4294901760
          %665 = vmatpush1.msra.mxu0 %v664
          %666 = vmatprep.subr.mxu0 0.0
          %667 = vmatpush1.msra.mxu0 0.0
          %668 = vmatprep.subr.mxu0 0.0
          %669 = vmatpush1.msra.mxu0 0.0
          %670 = vmatprep.subr.mxu0 0.0
          %671 = vmatpush1.msra.mxu0 0.0
          %672 = vmatprep.subr.mxu0 0.0
          %673 = vmatpush1.msra.mxu0 0.0
          %674 = vmatprep.subr.mxu0 0.0
          %675 = vmatpush1.msra.mxu0 0.0
          %676 = vmatprep.subr.mxu0 0.0
          %677 = vmatpush1.msra.mxu0 0.0
          %678 = vmatprep.subr.mxu0 0.0
          %679 = vmatpush1.msra.mxu0 0.0
          %680 = vmatprep.subr.mxu0 0.0
          %681 = vmatpush1.msra.mxu0 0.0
          %682 = vmatprep.subr.mxu0 0.0
          %683 = vmatpush1.msra.mxu0 0.0
          %684 = vmatprep.subr.mxu0 0.0
          %685 = vmatpush1.msra.mxu0 0.0
          %686 = vmatprep.subr.mxu0 0.0
          %687 = vmatpush1.msra.mxu0 0.0
          %688 = vmatprep.subr.mxu0 0.0
          %689 = vmatpush1.msra.mxu0 0.0
          %690 = vmatprep.subr.mxu0 0.0
          %691 = vmatpush1.msra.mxu0 0.0
          %692 = vmatprep.subr.mxu0 0.0
          %693 = vmatpush1.msra.mxu0 0.0
          %694 = vmatprep.subr.mxu0 0.0
          %695 = vmatpush1.msra.mxu0 0.0
          %696 = vmatprep.subr.mxu0 0.0
          %697 = vmatpush1.msra.mxu0 0.0
          %698 = vmatprep.subr.mxu0 0.0
          %699 = vmatpush1.msra.mxu0 0.0
          %700 = vmatprep.subr.mxu0 0.0
          %701 = vmatpush1.msra.mxu0 0.0
          %702 = vmatprep.subr.mxu0 0.0
          %703 = vmatpush1.msra.mxu0 0.0
          %704 = vmatprep.subr.mxu0 0.0
          %705 = vmatpush1.msra.mxu0 0.0
          %706 = vmatprep.subr.mxu0 0.0
          %707 = vmatpush1.msra.mxu0 0.0
          %708 = vmatprep.subr.mxu0 0.0
          %709 = vmatpush1.msra.mxu0 0.0
          %710 = vmatprep.subr.mxu0 0.0
          %711 = vmatpush1.msra.mxu0 0.0
          %712 = vmatprep.subr.mxu0 0.0
          %713 = vmatpush1.msra.mxu0 0.0
          %714 = vmatprep.subr.mxu0 0.0
          %715 = vmatpush1.msra.mxu0 0.0
          %716 = vmatprep.subr.mxu0 0.0
          %717 = vmatpush1.msra.mxu0 0.0
          %718 = vmatprep.subr.mxu0 0.0
          %719 = vmatpush1.msra.mxu0 0.0
          %720 = vmatprep.subr.mxu0 0.0
          %721 = vmatpush1.msra.mxu0 0.0
          %722 = vmatprep.subr.mxu0 0.0
          %723 = vmatpush1.msra.mxu0 0.0
          %724 = vmatprep.subr.mxu0 0.0
          %725 = vmatpush1.msra.mxu0 0.0
          %726 = vmatprep.subr.mxu0 0.0
          %727 = vmatpush1.msra.mxu0 0.0
          %728 = vmatprep.mubr.f32.mxu0 0.0
          %v729 = vand.u32 %v386, 4294901760
          %730 = vmatmul.mubr.f32.gmra.mrb[0].mxu0 %v729
          %v731 = vpop.f32.mrb[0].mxu0
          %v732 = vadd.f32 %v506, %v731
          %v733 = vpop.f32.mrb[0].mxu0
          %734 = vmatprep.mubr.f32.mxu0 0.0
          %v735 = vand.u32 %v389, 4294901760
          %736 = vmatmul.mubr.f32.gmra.mrb[0].mxu0 %v735
          %v737 = vpop.f32.mrb[0].mxu0
          %v738 = vadd.f32 %v516, %v737
          %v739 = vpop.f32.mrb[0].mxu0
          %740 = vmatprep.mubr.f32.mxu0 0.0
          %v741 = vand.u32 %v392, 4294901760
          %742 = vmatmul.mubr.f32.gmra.mrb[0].mxu0 %v741
          %v743 = vpop.f32.mrb[0].mxu0
          %v744 = vadd.f32 %v526, %v743
          %v745 = vpop.f32.mrb[0].mxu0
          %746 = vmatprep.mubr.f32.mxu0 0.0
          %v747 = vand.u32 %v395, 4294901760
          %748 = vmatmul.mubr.f32.gmra.mrb[0].mxu0 %v747
          %v749 = vpop.f32.mrb[0].mxu0
          %v750 = vadd.f32 %v536, %v749
          %v751 = vpop.f32.mrb[0].mxu0
          %752 = vmatprep.mubr.f32.mxu0 0.0
          %v753 = vand.u32 %v398, 4294901760
          %754 = vmatmul.mubr.f32.gmra.mrb[0].mxu0 %v753
          %v755 = vpop.f32.mrb[0].mxu0
          %v756 = vadd.f32 %v546, %v755
          %v757 = vpop.f32.mrb[0].mxu0
          %758 = vmatprep.mubr.f32.mxu0 0.0
          %v759 = vand.u32 %v401, 4294901760
          %760 = vmatmul.mubr.f32.gmra.mrb[0].mxu0 %v759
          %v761 = vpop.f32.mrb[0].mxu0
          %v762 = vadd.f32 %v556, %v761
          %v763 = vpop.f32.mrb[0].mxu0
          %764 = vmatprep.mubr.f32.mxu0 0.0
          %v765 = vand.u32 %v404, 4294901760
          %766 = vmatmul.mubr.f32.gmra.mrb[0].mxu0 %v765
          %v767 = vpop.f32.mrb[0].mxu0
          %v768 = vadd.f32 %v566, %v767
          %v769 = vpop.f32.mrb[0].mxu0
          %770 = vmatprep.mubr.f32.mxu0 0.0
          %v771 = vand.u32 %v407, 4294901760
          %772 = vmatmul.mubr.f32.gmra.mrb[0].mxu0 %v771
          %v773 = vpop.f32.mrb[0].mxu0
          %v774 = vadd.f32 %v576, %v773
          %v775 = vpop.f32.mrb[0].mxu0
          %776 = vmatprep.mubr.f32.mxu0 0.0
          %v777 = vand.u32 %v410, 4294901760
          %778 = vmatmul.mubr.f32.gmra.mrb[0].mxu0 %v777
          %v779 = vpop.f32.mrb[0].mxu0
          %v780 = vadd.f32 %v586, %v779
          %v781 = vpop.f32.mrb[0].mxu0
          %782 = vmatprep.mubr.f32.mxu0 0.0
          %v783 = vand.u32 %v413, 4294901760
          %784 = vmatmul.mubr.f32.gmra.mrb[0].mxu0 %v783
          %v785 = vpop.f32.mrb[0].mxu0
          %v786 = vadd.f32 %v596, %v785
          %v787 = vpop.f32.mrb[0].mxu0
          %788 = vmatprep.mubr.f32.mxu0 0.0
          %v789 = vand.u32 %v416, 4294901760
          %790 = vmatmul.mubr.f32.gmra.mrb[0].mxu0 %v789
          %v791 = vpop.f32.mrb[0].mxu0
          %v792 = vadd.f32 %v606, %v791
          %v793 = vpop.f32.mrb[0].mxu0
          %794 = vmatprep.mubr.f32.mxu0 0.0
          %v795 = vand.u32 %v419, 4294901760
          %796 = vmatmul.mubr.f32.gmra.mrb[0].mxu0 %v795
          %v797 = vpop.f32.mrb[0].mxu0
          %v798 = vadd.f32 %v616, %v797
          %v799 = vpop.f32.mrb[0].mxu0
          %800 = vmatprep.mubr.f32.mxu0 0.0
          %v801 = vand.u32 %v422, 4294901760
          %802 = vmatmul.mubr.f32.gmra.mrb[0].mxu0 %v801
          %v803 = vpop.f32.mrb[0].mxu0
          %v804 = vadd.f32 %v626, %v803
          %v805 = vpop.f32.mrb[0].mxu0
          %806 = vmatprep.mubr.f32.mxu0 0.0
          %v807 = vand.u32 %v425, 4294901760
          %808 = vmatmul.mubr.f32.gmra.mrb[0].mxu0 %v807
          %v809 = vpop.f32.mrb[0].mxu0
          %v810 = vadd.f32 %v636, %v809
          %v811 = vpop.f32.mrb[0].mxu0
          %812 = vmatprep.mubr.f32.mxu0 0.0
          %v813 = vand.u32 %v428, 4294901760
          %814 = vmatmul.mubr.f32.gmra.mrb[0].mxu0 %v813
          %v815 = vpop.f32.mrb[0].mxu0
          %v816 = vadd.f32 %v646, %v815
          %v817 = vpop.f32.mrb[0].mxu0
          %818 = vmatprep.mubr.f32.mxu0 0.0
          %v819 = vand.u32 %v431, 4294901760
          %820 = vmatmul.mubr.f32.gmra.mrb[0].mxu0 %v819
          %v821 = vpop.f32.mrb[0].mxu0
          %v822 = vadd.f32 %v656, %v821
          %v823 = vpop.f32.mrb[0].mxu0
          %824 = vdwg.mxu0
          %825 = vmatprep.subr.mxu0 0.0
          %v826 = vand.u32 %v376, 4294901760
          %v827 = vsub.f32 %v376, %v826
          %828 = vmatpush1.msra.mxu0 %v827
          %829 = vmatprep.subr.mxu0 0.0
          %830 = vmatpush1.msra.mxu0 0.0
          %831 = vmatprep.subr.mxu0 0.0
          %832 = vmatpush1.msra.mxu0 0.0
          %833 = vmatprep.subr.mxu0 0.0
          %834 = vmatpush1.msra.mxu0 0.0
          %835 = vmatprep.subr.mxu0 0.0
          %836 = vmatpush1.msra.mxu0 0.0
          %837 = vmatprep.subr.mxu0 0.0
          %838 = vmatpush1.msra.mxu0 0.0
          %839 = vmatprep.subr.mxu0 0.0
          %840 = vmatpush1.msra.mxu0 0.0
          %841 = vmatprep.subr.mxu0 0.0
          %842 = vmatpush1.msra.mxu0 0.0
          %843 = vmatprep.subr.mxu0 0.0
          %844 = vmatpush1.msra.mxu0 0.0
          %845 = vmatprep.subr.mxu0 0.0
          %846 = vmatpush1.msra.mxu0 0.0
          %847 = vmatprep.subr.mxu0 0.0
          %848 = vmatpush1.msra.mxu0 0.0
          %849 = vmatprep.subr.mxu0 0.0
          %850 = vmatpush1.msra.mxu0 0.0
          %851 = vmatprep.subr.mxu0 0.0
          %852 = vmatpush1.msra.mxu0 0.0
          %853 = vmatprep.subr.mxu0 0.0
          %854 = vmatpush1.msra.mxu0 0.0
          %855 = vmatprep.subr.mxu0 0.0
          %856 = vmatpush1.msra.mxu0 0.0
          %857 = vmatprep.subr.mxu0 0.0
          %858 = vmatpush1.msra.mxu0 0.0
          %859 = vmatprep.subr.mxu0 0.0
          %860 = vmatpush1.msra.mxu0 0.0
          %861 = vmatprep.subr.mxu0 0.0
          %862 = vmatpush1.msra.mxu0 0.0
          %863 = vmatprep.subr.mxu0 0.0
          %864 = vmatpush1.msra.mxu0 0.0
          %865 = vmatprep.subr.mxu0 0.0
          %866 = vmatpush1.msra.mxu0 0.0
          %867 = vmatprep.subr.mxu0 0.0
          %868 = vmatpush1.msra.mxu0 0.0
          %869 = vmatprep.subr.mxu0 0.0
          %870 = vmatpush1.msra.mxu0 0.0
          %871 = vmatprep.subr.mxu0 0.0
          %872 = vmatpush1.msra.mxu0 0.0
          %873 = vmatprep.subr.mxu0 0.0
          %874 = vmatpush1.msra.mxu0 0.0
          %875 = vmatprep.subr.mxu0 0.0
          %876 = vmatpush1.msra.mxu0 0.0
          %877 = vmatprep.subr.mxu0 0.0
          %878 = vmatpush1.msra.mxu0 0.0
          %879 = vmatprep.subr.mxu0 0.0
          %880 = vmatpush1.msra.mxu0 0.0
          %881 = vmatprep.subr.mxu0 0.0
          %882 = vmatpush1.msra.mxu0 0.0
          %883 = vmatprep.subr.mxu0 0.0
          %884 = vmatpush1.msra.mxu0 0.0
          %885 = vmatprep.subr.mxu0 0.0
          %886 = vmatpush1.msra.mxu0 0.0
          %887 = vmatprep.subr.mxu0 0.0
          %888 = vmatpush1.msra.mxu0 0.0
          %889 = vmatprep.subr.mxu0 0.0
          %890 = vmatpush1.msra.mxu0 0.0
          %891 = vmatprep.mubr.f32.mxu0 0.0
          %v892 = vand.u32 %v386, 4294901760
          %v893 = vsub.f32 %v386, %v892
          %894 = vmatmul.mubr.f32.gmra.mrb[0].mxu0 %v893
          %v895 = vpop.f32.mrb[0].mxu0
          %v896 = vadd.f32 %v732, %v895
          %v897 = vpop.f32.mrb[0].mxu0
          %898 = vmatprep.mubr.f32.mxu0 0.0
          %v899 = vand.u32 %v389, 4294901760
          %v900 = vsub.f32 %v389, %v899
          %901 = vmatmul.mubr.f32.gmra.mrb[0].mxu0 %v900
          %v902 = vpop.f32.mrb[0].mxu0
          %v903 = vadd.f32 %v738, %v902
          %v904 = vpop.f32.mrb[0].mxu0
          %905 = vmatprep.mubr.f32.mxu0 0.0
          %v906 = vand.u32 %v392, 4294901760
          %v907 = vsub.f32 %v392, %v906
          %908 = vmatmul.mubr.f32.gmra.mrb[0].mxu0 %v907
          %v909 = vpop.f32.mrb[0].mxu0
          %v910 = vadd.f32 %v744, %v909
          %v911 = vpop.f32.mrb[0].mxu0
          %912 = vmatprep.mubr.f32.mxu0 0.0
          %v913 = vand.u32 %v395, 4294901760
          %v914 = vsub.f32 %v395, %v913
          %915 = vmatmul.mubr.f32.gmra.mrb[0].mxu0 %v914
          %v916 = vpop.f32.mrb[0].mxu0
          %v917 = vadd.f32 %v750, %v916
          %v918 = vpop.f32.mrb[0].mxu0
          %919 = vmatprep.mubr.f32.mxu0 0.0
          %v920 = vand.u32 %v398, 4294901760
          %v921 = vsub.f32 %v398, %v920
          %922 = vmatmul.mubr.f32.gmra.mrb[0].mxu0 %v921
          %v923 = vpop.f32.mrb[0].mxu0
          %v924 = vadd.f32 %v756, %v923
          %v925 = vpop.f32.mrb[0].mxu0
          %926 = vmatprep.mubr.f32.mxu0 0.0
          %v927 = vand.u32 %v401, 4294901760
          %v928 = vsub.f32 %v401, %v927
          %929 = vmatmul.mubr.f32.gmra.mrb[0].mxu0 %v928
          %v930 = vpop.f32.mrb[0].mxu0
          %v931 = vadd.f32 %v762, %v930
          %v932 = vpop.f32.mrb[0].mxu0
          %933 = vmatprep.mubr.f32.mxu0 0.0
          %v934 = vand.u32 %v404, 4294901760
          %v935 = vsub.f32 %v404, %v934
          %936 = vmatmul.mubr.f32.gmra.mrb[0].mxu0 %v935
          %v937 = vpop.f32.mrb[0].mxu0
          %v938 = vadd.f32 %v768, %v937
          %v939 = vpop.f32.mrb[0].mxu0
          %940 = vmatprep.mubr.f32.mxu0 0.0
          %v941 = vand.u32 %v407, 4294901760
          %v942 = vsub.f32 %v407, %v941
          %943 = vmatmul.mubr.f32.gmra.mrb[0].mxu0 %v942
          %v944 = vpop.f32.mrb[0].mxu0
          %v945 = vadd.f32 %v774, %v944
          %v946 = vpop.f32.mrb[0].mxu0
          %947 = vmatprep.mubr.f32.mxu0 0.0
          %v948 = vand.u32 %v410, 4294901760
          %v949 = vsub.f32 %v410, %v948
          %950 = vmatmul.mubr.f32.gmra.mrb[0].mxu0 %v949
          %v951 = vpop.f32.mrb[0].mxu0
          %v952 = vadd.f32 %v780, %v951
          %v953 = vpop.f32.mrb[0].mxu0
          %954 = vmatprep.mubr.f32.mxu0 0.0
          %v955 = vand.u32 %v413, 4294901760
          %v956 = vsub.f32 %v413, %v955
          %957 = vmatmul.mubr.f32.gmra.mrb[0].mxu0 %v956
          %v958 = vpop.f32.mrb[0].mxu0
          %v959 = vadd.f32 %v786, %v958
          %v960 = vpop.f32.mrb[0].mxu0
          %961 = vmatprep.mubr.f32.mxu0 0.0
          %v962 = vand.u32 %v416, 4294901760
          %v963 = vsub.f32 %v416, %v962
          %964 = vmatmul.mubr.f32.gmra.mrb[0].mxu0 %v963
          %v965 = vpop.f32.mrb[0].mxu0
          %v966 = vadd.f32 %v792, %v965
          %v967 = vpop.f32.mrb[0].mxu0
          %968 = vmatprep.mubr.f32.mxu0 0.0
          %v969 = vand.u32 %v419, 4294901760
          %v970 = vsub.f32 %v419, %v969
          %971 = vmatmul.mubr.f32.gmra.mrb[0].mxu0 %v970
          %v972 = vpop.f32.mrb[0].mxu0
          %v973 = vadd.f32 %v798, %v972
          %v974 = vpop.f32.mrb[0].mxu0
          %975 = vmatprep.mubr.f32.mxu0 0.0
          %v976 = vand.u32 %v422, 4294901760
          %v977 = vsub.f32 %v422, %v976
          %978 = vmatmul.mubr.f32.gmra.mrb[0].mxu0 %v977
          %v979 = vpop.f32.mrb[0].mxu0
          %v980 = vadd.f32 %v804, %v979
          %v981 = vpop.f32.mrb[0].mxu0
          %982 = vmatprep.mubr.f32.mxu0 0.0
          %v983 = vand.u32 %v425, 4294901760
          %v984 = vsub.f32 %v425, %v983
          %985 = vmatmul.mubr.f32.gmra.mrb[0].mxu0 %v984
          %v986 = vpop.f32.mrb[0].mxu0
          %v987 = vadd.f32 %v810, %v986
          %v988 = vpop.f32.mrb[0].mxu0
          %989 = vmatprep.mubr.f32.mxu0 0.0
          %v990 = vand.u32 %v428, 4294901760
          %v991 = vsub.f32 %v428, %v990
          %992 = vmatmul.mubr.f32.gmra.mrb[0].mxu0 %v991
          %v993 = vpop.f32.mrb[0].mxu0
          %v994 = vadd.f32 %v816, %v993
          %v995 = vpop.f32.mrb[0].mxu0
          %996 = vmatprep.mubr.f32.mxu0 0.0
          %v997 = vand.u32 %v431, 4294901760
          %v998 = vsub.f32 %v431, %v997
          %999 = vmatmul.mubr.f32.gmra.mrb[0].mxu0 %v998
          %v1000 = vpop.f32.mrb[0].mxu0
          %v1001 = vadd.f32 %v822, %v1000
          %v1002 = vpop.f32.mrb[0].mxu0
          %1003 = vdwg.mxu0
          %1004 = vmatprep.subr.mxu0 0.0
          %v1005 = vand.u32 %v376, 4294901760
          %1006 = vmatpush1.msra.mxu0 %v1005
          %1007 = vmatprep.subr.mxu0 0.0
          %1008 = vmatpush1.msra.mxu0 0.0
          %1009 = vmatprep.subr.mxu0 0.0
          %1010 = vmatpush1.msra.mxu0 0.0
          %1011 = vmatprep.subr.mxu0 0.0
          %1012 = vmatpush1.msra.mxu0 0.0
          %1013 = vmatprep.subr.mxu0 0.0
          %1014 = vmatpush1.msra.mxu0 0.0
          %1015 = vmatprep.subr.mxu0 0.0
          %1016 = vmatpush1.msra.mxu0 0.0
          %1017 = vmatprep.subr.mxu0 0.0
          %1018 = vmatpush1.msra.mxu0 0.0
          %1019 = vmatprep.subr.mxu0 0.0
          %1020 = vmatpush1.msra.mxu0 0.0
          %1021 = vmatprep.subr.mxu0 0.0
          %1022 = vmatpush1.msra.mxu0 0.0
          %1023 = vmatprep.subr.mxu0 0.0
          %1024 = vmatpush1.msra.mxu0 0.0
          %1025 = vmatprep.subr.mxu0 0.0
          %1026 = vmatpush1.msra.mxu0 0.0
          %1027 = vmatprep.subr.mxu0 0.0
          %1028 = vmatpush1.msra.mxu0 0.0
          %1029 = vmatprep.subr.mxu0 0.0
          %1030 = vmatpush1.msra.mxu0 0.0
          %1031 = vmatprep.subr.mxu0 0.0
          %1032 = vmatpush1.msra.mxu0 0.0
          %1033 = vmatprep.subr.mxu0 0.0
          %1034 = vmatpush1.msra.mxu0 0.0
          %1035 = vmatprep.subr.mxu0 0.0
          %1036 = vmatpush1.msra.mxu0 0.0
          %1037 = vmatprep.subr.mxu0 0.0
          %1038 = vmatpush1.msra.mxu0 0.0
          %1039 = vmatprep.subr.mxu0 0.0
          %1040 = vmatpush1.msra.mxu0 0.0
          %1041 = vmatprep.subr.mxu0 0.0
          %1042 = vmatpush1.msra.mxu0 0.0
          %1043 = vmatprep.subr.mxu0 0.0
          %1044 = vmatpush1.msra.mxu0 0.0
          %1045 = vmatprep.subr.mxu0 0.0
          %1046 = vmatpush1.msra.mxu0 0.0
          %1047 = vmatprep.subr.mxu0 0.0
          %1048 = vmatpush1.msra.mxu0 0.0
          %1049 = vmatprep.subr.mxu0 0.0
          %1050 = vmatpush1.msra.mxu0 0.0
          %1051 = vmatprep.subr.mxu0 0.0
          %1052 = vmatpush1.msra.mxu0 0.0
          %1053 = vmatprep.subr.mxu0 0.0
          %1054 = vmatpush1.msra.mxu0 0.0
          %1055 = vmatprep.subr.mxu0 0.0
          %1056 = vmatpush1.msra.mxu0 0.0
          %1057 = vmatprep.subr.mxu0 0.0
          %1058 = vmatpush1.msra.mxu0 0.0
          %1059 = vmatprep.subr.mxu0 0.0
          %1060 = vmatpush1.msra.mxu0 0.0
          %1061 = vmatprep.subr.mxu0 0.0
          %1062 = vmatpush1.msra.mxu0 0.0
          %1063 = vmatprep.subr.mxu0 0.0
          %1064 = vmatpush1.msra.mxu0 0.0
          %1065 = vmatprep.subr.mxu0 0.0
          %1066 = vmatpush1.msra.mxu0 0.0
          %1067 = vmatprep.subr.mxu0 0.0
          %1068 = vmatpush1.msra.mxu0 0.0
          %1069 = vmatprep.mubr.f32.mxu0 0.0
          %v1070 = vand.u32 %v386, 4294901760
          %v1071 = vsub.f32 %v386, %v1070
          %v1072 = vand.u32 %v1071, 4294901760
          %1073 = vmatmul.mubr.f32.gmra.mrb[0].mxu0 %v1072
          %v1074 = vpop.f32.mrb[0].mxu0
          %v1075 = vadd.f32 %v896, %v1074
          %v1076 = vpop.f32.mrb[0].mxu0
          %1077 = vmatprep.mubr.f32.mxu0 0.0
          %v1078 = vand.u32 %v389, 4294901760
          %v1079 = vsub.f32 %v389, %v1078
          %v1080 = vand.u32 %v1079, 4294901760
          %1081 = vmatmul.mubr.f32.gmra.mrb[0].mxu0 %v1080
          %v1082 = vpop.f32.mrb[0].mxu0
          %v1083 = vadd.f32 %v903, %v1082
          %v1084 = vpop.f32.mrb[0].mxu0
          %1085 = vmatprep.mubr.f32.mxu0 0.0
          %v1086 = vand.u32 %v392, 4294901760
          %v1087 = vsub.f32 %v392, %v1086
          %v1088 = vand.u32 %v1087, 4294901760
          %1089 = vmatmul.mubr.f32.gmra.mrb[0].mxu0 %v1088
          %v1090 = vpop.f32.mrb[0].mxu0
          %v1091 = vadd.f32 %v910, %v1090
          %v1092 = vpop.f32.mrb[0].mxu0
          %1093 = vmatprep.mubr.f32.mxu0 0.0
          %v1094 = vand.u32 %v395, 4294901760
          %v1095 = vsub.f32 %v395, %v1094
          %v1096 = vand.u32 %v1095, 4294901760
          %1097 = vmatmul.mubr.f32.gmra.mrb[0].mxu0 %v1096
          %v1098 = vpop.f32.mrb[0].mxu0
          %v1099 = vadd.f32 %v917, %v1098
          %v1100 = vpop.f32.mrb[0].mxu0
          %1101 = vmatprep.mubr.f32.mxu0 0.0
          %v1102 = vand.u32 %v398, 4294901760
          %v1103 = vsub.f32 %v398, %v1102
          %v1104 = vand.u32 %v1103, 4294901760
          %1105 = vmatmul.mubr.f32.gmra.mrb[0].mxu0 %v1104
          %v1106 = vpop.f32.mrb[0].mxu0
          %v1107 = vadd.f32 %v924, %v1106
          %v1108 = vpop.f32.mrb[0].mxu0
          %1109 = vmatprep.mubr.f32.mxu0 0.0
          %v1110 = vand.u32 %v401, 4294901760
          %v1111 = vsub.f32 %v401, %v1110
          %v1112 = vand.u32 %v1111, 4294901760
          %1113 = vmatmul.mubr.f32.gmra.mrb[0].mxu0 %v1112
          %v1114 = vpop.f32.mrb[0].mxu0
          %v1115 = vadd.f32 %v931, %v1114
          %v1116 = vpop.f32.mrb[0].mxu0
          %1117 = vmatprep.mubr.f32.mxu0 0.0
          %v1118 = vand.u32 %v404, 4294901760
          %v1119 = vsub.f32 %v404, %v1118
          %v1120 = vand.u32 %v1119, 4294901760
          %1121 = vmatmul.mubr.f32.gmra.mrb[0].mxu0 %v1120
          %v1122 = vpop.f32.mrb[0].mxu0
          %v1123 = vadd.f32 %v938, %v1122
          %v1124 = vpop.f32.mrb[0].mxu0
          %1125 = vmatprep.mubr.f32.mxu0 0.0
          %v1126 = vand.u32 %v407, 4294901760
          %v1127 = vsub.f32 %v407, %v1126
          %v1128 = vand.u32 %v1127, 4294901760
          %1129 = vmatmul.mubr.f32.gmra.mrb[0].mxu0 %v1128
          %v1130 = vpop.f32.mrb[0].mxu0
          %v1131 = vadd.f32 %v945, %v1130
          %v1132 = vpop.f32.mrb[0].mxu0
          %1133 = vmatprep.mubr.f32.mxu0 0.0
          %v1134 = vand.u32 %v410, 4294901760
          %v1135 = vsub.f32 %v410, %v1134
          %v1136 = vand.u32 %v1135, 4294901760
          %1137 = vmatmul.mubr.f32.gmra.mrb[0].mxu0 %v1136
          %v1138 = vpop.f32.mrb[0].mxu0
          %v1139 = vadd.f32 %v952, %v1138
          %v1140 = vpop.f32.mrb[0].mxu0
          %1141 = vmatprep.mubr.f32.mxu0 0.0
          %v1142 = vand.u32 %v413, 4294901760
          %v1143 = vsub.f32 %v413, %v1142
          %v1144 = vand.u32 %v1143, 4294901760
          %1145 = vmatmul.mubr.f32.gmra.mrb[0].mxu0 %v1144
          %v1146 = vpop.f32.mrb[0].mxu0
          %v1147 = vadd.f32 %v959, %v1146
          %v1148 = vpop.f32.mrb[0].mxu0
          %1149 = vmatprep.mubr.f32.mxu0 0.0
          %v1150 = vand.u32 %v416, 4294901760
          %v1151 = vsub.f32 %v416, %v1150
          %v1152 = vand.u32 %v1151, 4294901760
          %1153 = vmatmul.mubr.f32.gmra.mrb[0].mxu0 %v1152
          %v1154 = vpop.f32.mrb[0].mxu0
          %v1155 = vadd.f32 %v966, %v1154
          %v1156 = vpop.f32.mrb[0].mxu0
          %1157 = vmatprep.mubr.f32.mxu0 0.0
          %v1158 = vand.u32 %v419, 4294901760
          %v1159 = vsub.f32 %v419, %v1158
          %v1160 = vand.u32 %v1159, 4294901760
          %1161 = vmatmul.mubr.f32.gmra.mrb[0].mxu0 %v1160
          %v1162 = vpop.f32.mrb[0].mxu0
          %v1163 = vadd.f32 %v973, %v1162
          %v1164 = vpop.f32.mrb[0].mxu0
          %1165 = vmatprep.mubr.f32.mxu0 0.0
          %v1166 = vand.u32 %v422, 4294901760
          %v1167 = vsub.f32 %v422, %v1166
          %v1168 = vand.u32 %v1167, 4294901760
          %1169 = vmatmul.mubr.f32.gmra.mrb[0].mxu0 %v1168
          %v1170 = vpop.f32.mrb[0].mxu0
          %v1171 = vadd.f32 %v980, %v1170
          %v1172 = vpop.f32.mrb[0].mxu0
          %1173 = vmatprep.mubr.f32.mxu0 0.0
          %v1174 = vand.u32 %v425, 4294901760
          %v1175 = vsub.f32 %v425, %v1174
          %v1176 = vand.u32 %v1175, 4294901760
          %1177 = vmatmul.mubr.f32.gmra.mrb[0].mxu0 %v1176
          %v1178 = vpop.f32.mrb[0].mxu0
          %v1179 = vadd.f32 %v987, %v1178
          %v1180 = vpop.f32.mrb[0].mxu0
          %1181 = vmatprep.mubr.f32.mxu0 0.0
          %v1182 = vand.u32 %v428, 4294901760
          %v1183 = vsub.f32 %v428, %v1182
          %v1184 = vand.u32 %v1183, 4294901760
          %1185 = vmatmul.mubr.f32.gmra.mrb[0].mxu0 %v1184
          %v1186 = vpop.f32.mrb[0].mxu0
          %v1187 = vadd.f32 %v994, %v1186
          %v1188 = vpop.f32.mrb[0].mxu0
          %1189 = vmatprep.mubr.f32.mxu0 0.0
          %v1190 = vand.u32 %v431, 4294901760
          %v1191 = vsub.f32 %v431, %v1190
          %v1192 = vand.u32 %v1191, 4294901760
          %1193 = vmatmul.mubr.f32.gmra.mrb[0].mxu0 %v1192
          %v1194 = vpop.f32.mrb[0].mxu0
          %v1195 = vadd.f32 %v1001, %v1194
          %v1196 = vpop.f32.mrb[0].mxu0
          %1197 = vdwg.mxu0
          %1198 = vmatprep.subr.mxu0 0.0
          %v1199 = vand.u32 %v376, 4294901760
          %v1200 = vsub.f32 %v376, %v1199
          %v1201 = vand.u32 %v1200, 4294901760
          %1202 = vmatpush1.msra.mxu0 %v1201
          %1203 = vmatprep.subr.mxu0 0.0
          %1204 = vmatpush1.msra.mxu0 0.0
          %1205 = vmatprep.subr.mxu0 0.0
          %1206 = vmatpush1.msra.mxu0 0.0
          %1207 = vmatprep.subr.mxu0 0.0
          %1208 = vmatpush1.msra.mxu0 0.0
          %1209 = vmatprep.subr.mxu0 0.0
          %1210 = vmatpush1.msra.mxu0 0.0
          %1211 = vmatprep.subr.mxu0 0.0
          %1212 = vmatpush1.msra.mxu0 0.0
          %1213 = vmatprep.subr.mxu0 0.0
          %1214 = vmatpush1.msra.mxu0 0.0
          %1215 = vmatprep.subr.mxu0 0.0
          %1216 = vmatpush1.msra.mxu0 0.0
          %1217 = vmatprep.subr.mxu0 0.0
          %1218 = vmatpush1.msra.mxu0 0.0
          %1219 = vmatprep.subr.mxu0 0.0
          %1220 = vmatpush1.msra.mxu0 0.0
          %1221 = vmatprep.subr.mxu0 0.0
          %1222 = vmatpush1.msra.mxu0 0.0
          %1223 = vmatprep.subr.mxu0 0.0
          %1224 = vmatpush1.msra.mxu0 0.0
          %1225 = vmatprep.subr.mxu0 0.0
          %1226 = vmatpush1.msra.mxu0 0.0
          %1227 = vmatprep.subr.mxu0 0.0
          %1228 = vmatpush1.msra.mxu0 0.0
          %1229 = vmatprep.subr.mxu0 0.0
          %1230 = vmatpush1.msra.mxu0 0.0
          %1231 = vmatprep.subr.mxu0 0.0
          %1232 = vmatpush1.msra.mxu0 0.0
          %1233 = vmatprep.subr.mxu0 0.0
          %1234 = vmatpush1.msra.mxu0 0.0
          %1235 = vmatprep.subr.mxu0 0.0
          %1236 = vmatpush1.msra.mxu0 0.0
          %1237 = vmatprep.subr.mxu0 0.0
          %1238 = vmatpush1.msra.mxu0 0.0
          %1239 = vmatprep.subr.mxu0 0.0
          %1240 = vmatpush1.msra.mxu0 0.0
          %1241 = vmatprep.subr.mxu0 0.0
          %1242 = vmatpush1.msra.mxu0 0.0
          %1243 = vmatprep.subr.mxu0 0.0
          %1244 = vmatpush1.msra.mxu0 0.0
          %1245 = vmatprep.subr.mxu0 0.0
          %1246 = vmatpush1.msra.mxu0 0.0
          %1247 = vmatprep.subr.mxu0 0.0
          %1248 = vmatpush1.msra.mxu0 0.0
          %1249 = vmatprep.subr.mxu0 0.0
          %1250 = vmatpush1.msra.mxu0 0.0
          %1251 = vmatprep.subr.mxu0 0.0
          %1252 = vmatpush1.msra.mxu0 0.0
          %1253 = vmatprep.subr.mxu0 0.0
          %1254 = vmatpush1.msra.mxu0 0.0
          %1255 = vmatprep.subr.mxu0 0.0
          %1256 = vmatpush1.msra.mxu0 0.0
          %1257 = vmatprep.subr.mxu0 0.0
          %1258 = vmatpush1.msra.mxu0 0.0
          %1259 = vmatprep.subr.mxu0 0.0
          %1260 = vmatpush1.msra.mxu0 0.0
          %1261 = vmatprep.subr.mxu0 0.0
          %1262 = vmatpush1.msra.mxu0 0.0
          %1263 = vmatprep.subr.mxu0 0.0
          %1264 = vmatpush1.msra.mxu0 0.0
          %1265 = vmatprep.mubr.f32.mxu0 0.0
          %v1266 = vand.u32 %v386, 4294901760
          %1267 = vmatmul.mubr.f32.gmra.mrb[0].mxu0 %v1266
          %v1268 = vpop.f32.mrb[0].mxu0
          %v1269 = vadd.f32 %v1075, %v1268
          %v1270 = vpop.f32.mrb[0].mxu0
          %1271 = vmatprep.mubr.f32.mxu0 0.0
          %v1272 = vand.u32 %v389, 4294901760
          %1273 = vmatmul.mubr.f32.gmra.mrb[0].mxu0 %v1272
          %v1274 = vpop.f32.mrb[0].mxu0
          %v1275 = vadd.f32 %v1083, %v1274
          %v1276 = vpop.f32.mrb[0].mxu0
          %1277 = vmatprep.mubr.f32.mxu0 0.0
          %v1278 = vand.u32 %v392, 4294901760
          %1279 = vmatmul.mubr.f32.gmra.mrb[0].mxu0 %v1278
          %v1280 = vpop.f32.mrb[0].mxu0
          %v1281 = vadd.f32 %v1091, %v1280
          %v1282 = vpop.f32.mrb[0].mxu0
          %1283 = vmatprep.mubr.f32.mxu0 0.0
          %v1284 = vand.u32 %v395, 4294901760
          %1285 = vmatmul.mubr.f32.gmra.mrb[0].mxu0 %v1284
          %v1286 = vpop.f32.mrb[0].mxu0
          %v1287 = vadd.f32 %v1099, %v1286
          %v1288 = vpop.f32.mrb[0].mxu0
          %1289 = vmatprep.mubr.f32.mxu0 0.0
          %v1290 = vand.u32 %v398, 4294901760
          %1291 = vmatmul.mubr.f32.gmra.mrb[0].mxu0 %v1290
          %v1292 = vpop.f32.mrb[0].mxu0
          %v1293 = vadd.f32 %v1107, %v1292
          %v1294 = vpop.f32.mrb[0].mxu0
          %1295 = vmatprep.mubr.f32.mxu0 0.0
          %v1296 = vand.u32 %v401, 4294901760
          %1297 = vmatmul.mubr.f32.gmra.mrb[0].mxu0 %v1296
          %v1298 = vpop.f32.mrb[0].mxu0
          %v1299 = vadd.f32 %v1115, %v1298
          %v1300 = vpop.f32.mrb[0].mxu0
          %1301 = vmatprep.mubr.f32.mxu0 0.0
          %v1302 = vand.u32 %v404, 4294901760
          %1303 = vmatmul.mubr.f32.gmra.mrb[0].mxu0 %v1302
          %v1304 = vpop.f32.mrb[0].mxu0
          %v1305 = vadd.f32 %v1123, %v1304
          %v1306 = vpop.f32.mrb[0].mxu0
          %1307 = vmatprep.mubr.f32.mxu0 0.0
          %v1308 = vand.u32 %v407, 4294901760
          %1309 = vmatmul.mubr.f32.gmra.mrb[0].mxu0 %v1308
          %v1310 = vpop.f32.mrb[0].mxu0
          %v1311 = vadd.f32 %v1131, %v1310
          %v1312 = vpop.f32.mrb[0].mxu0
          %1313 = vmatprep.mubr.f32.mxu0 0.0
          %v1314 = vand.u32 %v410, 4294901760
          %1315 = vmatmul.mubr.f32.gmra.mrb[0].mxu0 %v1314
          %v1316 = vpop.f32.mrb[0].mxu0
          %v1317 = vadd.f32 %v1139, %v1316
          %v1318 = vpop.f32.mrb[0].mxu0
          %1319 = vmatprep.mubr.f32.mxu0 0.0
          %v1320 = vand.u32 %v413, 4294901760
          %1321 = vmatmul.mubr.f32.gmra.mrb[0].mxu0 %v1320
          %v1322 = vpop.f32.mrb[0].mxu0
          %v1323 = vadd.f32 %v1147, %v1322
          %v1324 = vpop.f32.mrb[0].mxu0
          %1325 = vmatprep.mubr.f32.mxu0 0.0
          %v1326 = vand.u32 %v416, 4294901760
          %1327 = vmatmul.mubr.f32.gmra.mrb[0].mxu0 %v1326
          %v1328 = vpop.f32.mrb[0].mxu0
          %v1329 = vadd.f32 %v1155, %v1328
          %v1330 = vpop.f32.mrb[0].mxu0
          %1331 = vmatprep.mubr.f32.mxu0 0.0
          %v1332 = vand.u32 %v419, 4294901760
          %1333 = vmatmul.mubr.f32.gmra.mrb[0].mxu0 %v1332
          %v1334 = vpop.f32.mrb[0].mxu0
          %v1335 = vadd.f32 %v1163, %v1334
          %v1336 = vpop.f32.mrb[0].mxu0
          %1337 = vmatprep.mubr.f32.mxu0 0.0
          %v1338 = vand.u32 %v422, 4294901760
          %1339 = vmatmul.mubr.f32.gmra.mrb[0].mxu0 %v1338
          %v1340 = vpop.f32.mrb[0].mxu0
          %v1341 = vadd.f32 %v1171, %v1340
          %v1342 = vpop.f32.mrb[0].mxu0
          %1343 = vmatprep.mubr.f32.mxu0 0.0
          %v1344 = vand.u32 %v425, 4294901760
          %1345 = vmatmul.mubr.f32.gmra.mrb[0].mxu0 %v1344
          %v1346 = vpop.f32.mrb[0].mxu0
          %v1347 = vadd.f32 %v1179, %v1346
          %v1348 = vpop.f32.mrb[0].mxu0
          %1349 = vmatprep.mubr.f32.mxu0 0.0
          %v1350 = vand.u32 %v428, 4294901760
          %1351 = vmatmul.mubr.f32.gmra.mrb[0].mxu0 %v1350
          %v1352 = vpop.f32.mrb[0].mxu0
          %v1353 = vadd.f32 %v1187, %v1352
          %v1354 = vpop.f32.mrb[0].mxu0
          %1355 = vmatprep.mubr.f32.mxu0 0.0
          %v1356 = vand.u32 %v431, 4294901760
          %1357 = vmatmul.mubr.f32.gmra.mrb[0].mxu0 %v1356
          %v1358 = vpop.f32.mrb[0].mxu0
          %v1359 = vadd.f32 %v1195, %v1358
          %v1360 = vpop.f32.mrb[0].mxu0
          %1361 = vdwg.mxu0
          %1362 = vmatprep.subr.mxu0 0.0
          %v1363 = vand.u32 %v376, 4294901760
          %1364 = vmatpush1.msra.mxu0 %v1363
          %1365 = vmatprep.subr.mxu0 0.0
          %1366 = vmatpush1.msra.mxu0 0.0
          %1367 = vmatprep.subr.mxu0 0.0
          %1368 = vmatpush1.msra.mxu0 0.0
          %1369 = vmatprep.subr.mxu0 0.0
          %1370 = vmatpush1.msra.mxu0 0.0
          %1371 = vmatprep.subr.mxu0 0.0
          %1372 = vmatpush1.msra.mxu0 0.0
          %1373 = vmatprep.subr.mxu0 0.0
          %1374 = vmatpush1.msra.mxu0 0.0
          %1375 = vmatprep.subr.mxu0 0.0
          %1376 = vmatpush1.msra.mxu0 0.0
          %1377 = vmatprep.subr.mxu0 0.0
          %1378 = vmatpush1.msra.mxu0 0.0
          %1379 = vmatprep.subr.mxu0 0.0
          %1380 = vmatpush1.msra.mxu0 0.0
          %1381 = vmatprep.subr.mxu0 0.0
          %1382 = vmatpush1.msra.mxu0 0.0
          %1383 = vmatprep.subr.mxu0 0.0
          %1384 = vmatpush1.msra.mxu0 0.0
          %1385 = vmatprep.subr.mxu0 0.0
          %1386 = vmatpush1.msra.mxu0 0.0
          %1387 = vmatprep.subr.mxu0 0.0
          %1388 = vmatpush1.msra.mxu0 0.0
          %1389 = vmatprep.subr.mxu0 0.0
          %1390 = vmatpush1.msra.mxu0 0.0
          %1391 = vmatprep.subr.mxu0 0.0
          %1392 = vmatpush1.msra.mxu0 0.0
          %1393 = vmatprep.subr.mxu0 0.0
          %1394 = vmatpush1.msra.mxu0 0.0
          %1395 = vmatprep.subr.mxu0 0.0
          %1396 = vmatpush1.msra.mxu0 0.0
          %1397 = vmatprep.subr.mxu0 0.0
          %1398 = vmatpush1.msra.mxu0 0.0
          %1399 = vmatprep.subr.mxu0 0.0
          %1400 = vmatpush1.msra.mxu0 0.0
          %1401 = vmatprep.subr.mxu0 0.0
          %1402 = vmatpush1.msra.mxu0 0.0
          %1403 = vmatprep.subr.mxu0 0.0
          %1404 = vmatpush1.msra.mxu0 0.0
          %1405 = vmatprep.subr.mxu0 0.0
          %1406 = vmatpush1.msra.mxu0 0.0
          %1407 = vmatprep.subr.mxu0 0.0
          %1408 = vmatpush1.msra.mxu0 0.0
          %1409 = vmatprep.subr.mxu0 0.0
          %1410 = vmatpush1.msra.mxu0 0.0
          %1411 = vmatprep.subr.mxu0 0.0
          %1412 = vmatpush1.msra.mxu0 0.0
          %1413 = vmatprep.subr.mxu0 0.0
          %1414 = vmatpush1.msra.mxu0 0.0
          %1415 = vmatprep.subr.mxu0 0.0
          %1416 = vmatpush1.msra.mxu0 0.0
          %1417 = vmatprep.subr.mxu0 0.0
          %1418 = vmatpush1.msra.mxu0 0.0
          %1419 = vmatprep.subr.mxu0 0.0
          %1420 = vmatpush1.msra.mxu0 0.0
          %1421 = vmatprep.subr.mxu0 0.0
          %1422 = vmatpush1.msra.mxu0 0.0
          %1423 = vmatprep.subr.mxu0 0.0
          %1424 = vmatpush1.msra.mxu0 0.0
          %1425 = vmatprep.subr.mxu0 0.0
          %1426 = vmatpush1.msra.mxu0 0.0
          %1427 = vmatprep.mubr.f32.mxu0 0.0
          %v1428 = vand.u32 %v386, 4294901760
          %1429 = vmatmul.mubr.f32.gmra.mrb[0].mxu0 %v1428
          %v1430 = vpop.f32.mrb[0].mxu0
          %v1431 = vadd.f32 %v1269, %v1430
          %v1432 = vpop.f32.mrb[0].mxu0
          %1433 = vmatprep.mubr.f32.mxu0 0.0
          %v1434 = vand.u32 %v389, 4294901760
          %1435 = vmatmul.mubr.f32.gmra.mrb[0].mxu0 %v1434
          %v1436 = vpop.f32.mrb[0].mxu0
          %v1437 = vadd.f32 %v1275, %v1436
          %v1438 = vpop.f32.mrb[0].mxu0
          %1439 = vmatprep.mubr.f32.mxu0 0.0
          %v1440 = vand.u32 %v392, 4294901760
          %1441 = vmatmul.mubr.f32.gmra.mrb[0].mxu0 %v1440
          %v1442 = vpop.f32.mrb[0].mxu0
          %v1443 = vadd.f32 %v1281, %v1442
          %v1444 = vpop.f32.mrb[0].mxu0
          %1445 = vmatprep.mubr.f32.mxu0 0.0
          %v1446 = vand.u32 %v395, 4294901760
          %1447 = vmatmul.mubr.f32.gmra.mrb[0].mxu0 %v1446
          %v1448 = vpop.f32.mrb[0].mxu0
          %v1449 = vadd.f32 %v1287, %v1448
          %v1450 = vpop.f32.mrb[0].mxu0
          %1451 = vmatprep.mubr.f32.mxu0 0.0
          %v1452 = vand.u32 %v398, 4294901760
          %1453 = vmatmul.mubr.f32.gmra.mrb[0].mxu0 %v1452
          %v1454 = vpop.f32.mrb[0].mxu0
          %v1455 = vadd.f32 %v1293, %v1454
          %v1456 = vpop.f32.mrb[0].mxu0
          %1457 = vmatprep.mubr.f32.mxu0 0.0
          %v1458 = vand.u32 %v401, 4294901760
          %1459 = vmatmul.mubr.f32.gmra.mrb[0].mxu0 %v1458
          %v1460 = vpop.f32.mrb[0].mxu0
          %v1461 = vadd.f32 %v1299, %v1460
          %v1462 = vpop.f32.mrb[0].mxu0
          %1463 = vmatprep.mubr.f32.mxu0 0.0
          %v1464 = vand.u32 %v404, 4294901760
          %1465 = vmatmul.mubr.f32.gmra.mrb[0].mxu0 %v1464
          %v1466 = vpop.f32.mrb[0].mxu0
          %v1467 = vadd.f32 %v1305, %v1466
          %v1468 = vpop.f32.mrb[0].mxu0
          %1469 = vmatprep.mubr.f32.mxu0 0.0
          %v1470 = vand.u32 %v407, 4294901760
          %1471 = vmatmul.mubr.f32.gmra.mrb[0].mxu0 %v1470
          %v1472 = vpop.f32.mrb[0].mxu0
          %v1473 = vadd.f32 %v1311, %v1472
          %v1474 = vpop.f32.mrb[0].mxu0
          %1475 = vmatprep.mubr.f32.mxu0 0.0
          %v1476 = vand.u32 %v410, 4294901760
          %1477 = vmatmul.mubr.f32.gmra.mrb[0].mxu0 %v1476
          %v1478 = vpop.f32.mrb[0].mxu0
          %v1479 = vadd.f32 %v1317, %v1478
          %v1480 = vpop.f32.mrb[0].mxu0
          %1481 = vmatprep.mubr.f32.mxu0 0.0
          %v1482 = vand.u32 %v413, 4294901760
          %1483 = vmatmul.mubr.f32.gmra.mrb[0].mxu0 %v1482
          %v1484 = vpop.f32.mrb[0].mxu0
          %v1485 = vadd.f32 %v1323, %v1484
          %v1486 = vpop.f32.mrb[0].mxu0
          %1487 = vmatprep.mubr.f32.mxu0 0.0
          %v1488 = vand.u32 %v416, 4294901760
          %1489 = vmatmul.mubr.f32.gmra.mrb[0].mxu0 %v1488
          %v1490 = vpop.f32.mrb[0].mxu0
          %v1491 = vadd.f32 %v1329, %v1490
          %v1492 = vpop.f32.mrb[0].mxu0
          %1493 = vmatprep.mubr.f32.mxu0 0.0
          %v1494 = vand.u32 %v419, 4294901760
          %1495 = vmatmul.mubr.f32.gmra.mrb[0].mxu0 %v1494
          %v1496 = vpop.f32.mrb[0].mxu0
          %v1497 = vadd.f32 %v1335, %v1496
          %v1498 = vpop.f32.mrb[0].mxu0
          %1499 = vmatprep.mubr.f32.mxu0 0.0
          %v1500 = vand.u32 %v422, 4294901760
          %1501 = vmatmul.mubr.f32.gmra.mrb[0].mxu0 %v1500
          %v1502 = vpop.f32.mrb[0].mxu0
          %v1503 = vadd.f32 %v1341, %v1502
          %v1504 = vpop.f32.mrb[0].mxu0
          %1505 = vmatprep.mubr.f32.mxu0 0.0
          %v1506 = vand.u32 %v425, 4294901760
          %1507 = vmatmul.mubr.f32.gmra.mrb[0].mxu0 %v1506
          %v1508 = vpop.f32.mrb[0].mxu0
          %v1509 = vadd.f32 %v1347, %v1508
          %v1510 = vpop.f32.mrb[0].mxu0
          %1511 = vmatprep.mubr.f32.mxu0 0.0
          %v1512 = vand.u32 %v428, 4294901760
          %1513 = vmatmul.mubr.f32.gmra.mrb[0].mxu0 %v1512
          %v1514 = vpop.f32.mrb[0].mxu0
          %v1515 = vadd.f32 %v1353, %v1514
          %v1516 = vpop.f32.mrb[0].mxu0
          %1517 = vmatprep.mubr.f32.mxu0 0.0
          %v1518 = vand.u32 %v431, 4294901760
          %1519 = vmatmul.mubr.f32.gmra.mrb[0].mxu0 %v1518
          %v1520 = vpop.f32.mrb[0].mxu0
          %v1521 = vadd.f32 %v1359, %v1520
          %v1522 = vpop.f32.mrb[0].mxu0
          %1523 = vdwg.mxu0
          %v1524 = vld [vmem:[#allocation2] sm:$0xff]
          %v1525 = vld [vmem:[#allocation2 + $0x8] sm:$0xff]
          %v1526 = vld [vmem:[#allocation2 + $0x10] sm:$0xff]
          %v1527 = vld [vmem:[#allocation2 + $0x18] sm:$0xff]
          %v1528 = vld [vmem:[#allocation2 + $0x20] sm:$0xff]
          %v1529 = vld [vmem:[#allocation2 + $0x28] sm:$0xff]
          %v1530 = vld [vmem:[#allocation2 + $0x30] sm:$0xff]
          %v1531 = vld [vmem:[#allocation2 + $0x38] sm:$0xff]
          %v1532 = vld [vmem:[#allocation2 + $0x40] sm:$0xff]
          %v1533 = vld [vmem:[#allocation2 + $0x48] sm:$0xff]
          %v1534 = vld [vmem:[#allocation2 + $0x50] sm:$0xff]
          %v1535 = vld [vmem:[#allocation2 + $0x58] sm:$0xff]
          %v1536 = vld [vmem:[#allocation2 + $0x60] sm:$0xff]
          %v1537 = vld [vmem:[#allocation2 + $0x68] sm:$0xff]
          %v1538 = vld [vmem:[#allocation2 + $0x70] sm:$0xff]
          %v1539 = vld [vmem:[#allocation2 + $0x78] sm:$0xff]
          %1540 = vmax.xlane.f32.xlu0 %v1431
          %v1541 = vpop.xlane.xlu0 %1540
          %1542 = vmax.xlane.f32.xlu0 %v1437
          %v1543 = vpop.xlane.xlu0 %1542
          %1544 = vmax.xlane.f32.xlu0 %v1443
          %v1545 = vpop.xlane.xlu0 %1544
          %1546 = vmax.xlane.f32.xlu0 %v1449
          %v1547 = vpop.xlane.xlu0 %1546
          %1548 = vmax.xlane.f32.xlu0 %v1455
          %v1549 = vpop.xlane.xlu0 %1548
          %1550 = vmax.xlane.f32.xlu0 %v1461
          %v1551 = vpop.xlane.xlu0 %1550
          %1552 = vmax.xlane.f32.xlu0 %v1467
          %v1553 = vpop.xlane.xlu0 %1552
          %1554 = vmax.xlane.f32.xlu0 %v1473
          %v1555 = vpop.xlane.xlu0 %1554
          %1556 = vmax.xlane.f32.xlu0 %v1479
          %v1557 = vpop.xlane.xlu0 %1556
          %1558 = vmax.xlane.f32.xlu0 %v1485
          %v1559 = vpop.xlane.xlu0 %1558
          %1560 = vmax.xlane.f32.xlu0 %v1491
          %v1561 = vpop.xlane.xlu0 %1560
          %1562 = vmax.xlane.f32.xlu0 %v1497
          %v1563 = vpop.xlane.xlu0 %1562
          %1564 = vmax.xlane.f32.xlu0 %v1503
          %v1565 = vpop.xlane.xlu0 %1564
          %1566 = vmax.xlane.f32.xlu0 %v1509
          %v1567 = vpop.xlane.xlu0 %1566
          %1568 = vmax.xlane.f32.xlu0 %v1515
          %v1569 = vpop.xlane.xlu0 %1568
          %1570 = vmax.xlane.f32.xlu0 %v1521
          %v1571 = vpop.xlane.xlu0 %1570
          %v1572 = vmax.f32 %v1524, %v1541
          %v1573 = vmax.f32 %v1525, %v1543
          %v1574 = vmax.f32 %v1526, %v1545
          %v1575 = vmax.f32 %v1527, %v1547
          %v1576 = vmax.f32 %v1528, %v1549
          %v1577 = vmax.f32 %v1529, %v1551
          %v1578 = vmax.f32 %v1530, %v1553
          %v1579 = vmax.f32 %v1531, %v1555
          %v1580 = vmax.f32 %v1532, %v1557
          %v1581 = vmax.f32 %v1533, %v1559
          %v1582 = vmax.f32 %v1534, %v1561
          %v1583 = vmax.f32 %v1535, %v1563
          %v1584 = vmax.f32 %v1536, %v1565
          %v1585 = vmax.f32 %v1537, %v1567
          %v1586 = vmax.f32 %v1538, %v1569
          %v1587 = vmax.f32 %v1539, %v1571
          %v1588 = vsub.f32 %v1524, %v1572
          %v1589 = vsub.f32 %v1525, %v1573
          %v1590 = vsub.f32 %v1526, %v1574
          %v1591 = vsub.f32 %v1527, %v1575
          %v1592 = vsub.f32 %v1528, %v1576
          %v1593 = vsub.f32 %v1529, %v1577
          %v1594 = vsub.f32 %v1530, %v1578
          %v1595 = vsub.f32 %v1531, %v1579
          %v1596 = vsub.f32 %v1532, %v1580
          %v1597 = vsub.f32 %v1533, %v1581
          %v1598 = vsub.f32 %v1534, %v1582
          %v1599 = vsub.f32 %v1535, %v1583
          %v1600 = vsub.f32 %v1536, %v1584
          %v1601 = vsub.f32 %v1537, %v1585
          %v1602 = vsub.f32 %v1538, %v1586
          %v1603 = vsub.f32 %v1539, %v1587
          %v1604 = vmul.f32 %v1588, 1.442695
          %v1605 = vpow.pop %v1604
          %v1606 = vmul.f32 %v1589, 1.442695
          %v1607 = vpow.pop %v1606
          %v1608 = vmul.f32 %v1590, 1.442695
          %v1609 = vpow.pop %v1608
          %v1610 = vmul.f32 %v1591, 1.442695
          %v1611 = vpow.pop %v1610
          %v1612 = vmul.f32 %v1592, 1.442695
          %v1613 = vpow.pop %v1612
          %v1614 = vmul.f32 %v1593, 1.442695
          %v1615 = vpow.pop %v1614
          %v1616 = vmul.f32 %v1594, 1.442695
          %v1617 = vpow.pop %v1616
          %v1618 = vmul.f32 %v1595, 1.442695
          %v1619 = vpow.pop %v1618
          %v1620 = vmul.f32 %v1596, 1.442695
          %v1621 = vpow.pop %v1620
          %v1622 = vmul.f32 %v1597, 1.442695
          %v1623 = vpow.pop %v1622
          %v1624 = vmul.f32 %v1598, 1.442695
          %v1625 = vpow.pop %v1624
          %v1626 = vmul.f32 %v1599, 1.442695
          %v1627 = vpow.pop %v1626
          %v1628 = vmul.f32 %v1600, 1.442695
          %v1629 = vpow.pop %v1628
          %v1630 = vmul.f32 %v1601, 1.442695
          %v1631 = vpow.pop %v1630
          %v1632 = vmul.f32 %v1602, 1.442695
          %v1633 = vpow.pop %v1632
          %v1634 = vmul.f32 %v1603, 1.442695
          %v1635 = vpow.pop %v1634
          %v1636 = vld [vmem:[#allocation3] sm:$0xff]
          %v1637 = vld [vmem:[#allocation3 + $0x8] sm:$0xff]
          %v1638 = vld [vmem:[#allocation3 + $0x10] sm:$0xff]
          %v1639 = vld [vmem:[#allocation3 + $0x18] sm:$0xff]
          %v1640 = vld [vmem:[#allocation3 + $0x20] sm:$0xff]
          %v1641 = vld [vmem:[#allocation3 + $0x28] sm:$0xff]
          %v1642 = vld [vmem:[#allocation3 + $0x30] sm:$0xff]
          %v1643 = vld [vmem:[#allocation3 + $0x38] sm:$0xff]
          %v1644 = vld [vmem:[#allocation3 + $0x40] sm:$0xff]
          %v1645 = vld [vmem:[#allocation3 + $0x48] sm:$0xff]
          %v1646 = vld [vmem:[#allocation3 + $0x50] sm:$0xff]
          %v1647 = vld [vmem:[#allocation3 + $0x58] sm:$0xff]
          %v1648 = vld [vmem:[#allocation3 + $0x60] sm:$0xff]
          %v1649 = vld [vmem:[#allocation3 + $0x68] sm:$0xff]
          %v1650 = vld [vmem:[#allocation3 + $0x70] sm:$0xff]
          %v1651 = vld [vmem:[#allocation3 + $0x78] sm:$0xff]
          %v1652 = vmul.f32 %v1605, %v1636
          %v1653 = vmul.f32 %v1607, %v1637
          %v1654 = vmul.f32 %v1609, %v1638
          %v1655 = vmul.f32 %v1611, %v1639
          %v1656 = vmul.f32 %v1613, %v1640
          %v1657 = vmul.f32 %v1615, %v1641
          %v1658 = vmul.f32 %v1617, %v1642
          %v1659 = vmul.f32 %v1619, %v1643
          %v1660 = vmul.f32 %v1621, %v1644
          %v1661 = vmul.f32 %v1623, %v1645
          %v1662 = vmul.f32 %v1625, %v1646
          %v1663 = vmul.f32 %v1627, %v1647
          %v1664 = vmul.f32 %v1629, %v1648
          %v1665 = vmul.f32 %v1631, %v1649
          %v1666 = vmul.f32 %v1633, %v1650
          %v1667 = vmul.f32 %v1635, %v1651
          %1669 = vset.pattern.permute.xlu0 0
          %1670 = vperm.xlu0 %1669, %v1572
          %v1671 = vpop.permute.xlu0 %1670
          %1674 = vset.pattern.permute.xlu0 0
          %1675 = vperm.xlu0 %1674, %v1573
          %v1676 = vpop.permute.xlu0 %1675
          %1679 = vset.pattern.permute.xlu0 0
          %1680 = vperm.xlu0 %1679, %v1574
          %v1681 = vpop.permute.xlu0 %1680
          %1684 = vset.pattern.permute.xlu0 0
          %1685 = vperm.xlu0 %1684, %v1575
          %v1686 = vpop.permute.xlu0 %1685
          %1689 = vset.pattern.permute.xlu0 0
          %1690 = vperm.xlu0 %1689, %v1576
          %v1691 = vpop.permute.xlu0 %1690
          %1694 = vset.pattern.permute.xlu0 0
          %1695 = vperm.xlu0 %1694, %v1577
          %v1696 = vpop.permute.xlu0 %1695
          %1699 = vset.pattern.permute.xlu0 0
          %1700 = vperm.xlu0 %1699, %v1578
          %v1701 = vpop.permute.xlu0 %1700
          %1704 = vset.pattern.permute.xlu0 0
          %1705 = vperm.xlu0 %1704, %v1579
          %v1706 = vpop.permute.xlu0 %1705
          %1709 = vset.pattern.permute.xlu0 0
          %1710 = vperm.xlu0 %1709, %v1580
          %v1711 = vpop.permute.xlu0 %1710
          %1714 = vset.pattern.permute.xlu0 0
          %1715 = vperm.xlu0 %1714, %v1581
          %v1716 = vpop.permute.xlu0 %1715
          %1719 = vset.pattern.permute.xlu0 0
          %1720 = vperm.xlu0 %1719, %v1582
          %v1721 = vpop.permute.xlu0 %1720
          %1724 = vset.pattern.permute.xlu0 0
          %1725 = vperm.xlu0 %1724, %v1583
          %v1726 = vpop.permute.xlu0 %1725
          %1729 = vset.pattern.permute.xlu0 0
          %1730 = vperm.xlu0 %1729, %v1584
          %v1731 = vpop.permute.xlu0 %1730
          %1734 = vset.pattern.permute.xlu0 0
          %1735 = vperm.xlu0 %1734, %v1585
          %v1736 = vpop.permute.xlu0 %1735
          %1739 = vset.pattern.permute.xlu0 0
          %1740 = vperm.xlu0 %1739, %v1586
          %v1741 = vpop.permute.xlu0 %1740
          %1744 = vset.pattern.permute.xlu0 0
          %1745 = vperm.xlu0 %1744, %v1587
          %v1746 = vpop.permute.xlu0 %1745
          %v1748 = vsub.f32 %v1431, %v1671
          %v1749 = vsub.f32 %v1437, %v1676
          %v1750 = vsub.f32 %v1443, %v1681
          %v1751 = vsub.f32 %v1449, %v1686
          %v1752 = vsub.f32 %v1455, %v1691
          %v1753 = vsub.f32 %v1461, %v1696
          %v1754 = vsub.f32 %v1467, %v1701
          %v1755 = vsub.f32 %v1473, %v1706
          %v1756 = vsub.f32 %v1479, %v1711
          %v1757 = vsub.f32 %v1485, %v1716
          %v1758 = vsub.f32 %v1491, %v1721
          %v1759 = vsub.f32 %v1497, %v1726
          %v1760 = vsub.f32 %v1503, %v1731
          %v1761 = vsub.f32 %v1509, %v1736
          %v1762 = vsub.f32 %v1515, %v1741
          %v1763 = vsub.f32 %v1521, %v1746
          %v1764 = vmul.f32 %v1748, 1.442695
          %v1765 = vpow.pop %v1764
          %v1766 = vmul.f32 %v1749, 1.442695
          %v1767 = vpow.pop %v1766
          %v1768 = vmul.f32 %v1750, 1.442695
          %v1769 = vpow.pop %v1768
          %v1770 = vmul.f32 %v1751, 1.442695
          %v1771 = vpow.pop %v1770
          %v1772 = vmul.f32 %v1752, 1.442695
          %v1773 = vpow.pop %v1772
          %v1774 = vmul.f32 %v1753, 1.442695
          %v1775 = vpow.pop %v1774
          %v1776 = vmul.f32 %v1754, 1.442695
          %v1777 = vpow.pop %v1776
          %v1778 = vmul.f32 %v1755, 1.442695
          %v1779 = vpow.pop %v1778
          %v1780 = vmul.f32 %v1756, 1.442695
          %v1781 = vpow.pop %v1780
          %v1782 = vmul.f32 %v1757, 1.442695
          %v1783 = vpow.pop %v1782
          %v1784 = vmul.f32 %v1758, 1.442695
          %v1785 = vpow.pop %v1784
          %v1786 = vmul.f32 %v1759, 1.442695
          %v1787 = vpow.pop %v1786
          %v1788 = vmul.f32 %v1760, 1.442695
          %v1789 = vpow.pop %v1788
          %v1790 = vmul.f32 %v1761, 1.442695
          %v1791 = vpow.pop %v1790
          %v1792 = vmul.f32 %v1762, 1.442695
          %v1793 = vpow.pop %v1792
          %v1794 = vmul.f32 %v1763, 1.442695
          %v1795 = vpow.pop %v1794
          %1796 = vadd.xlane.f32.xlu0 %v1765
          %v1797 = vpop.xlane.xlu0 %1796
          %1798 = vadd.xlane.f32.xlu0 %v1767
          %v1799 = vpop.xlane.xlu0 %1798
          %1800 = vadd.xlane.f32.xlu0 %v1769
          %v1801 = vpop.xlane.xlu0 %1800
          %1802 = vadd.xlane.f32.xlu0 %v1771
          %v1803 = vpop.xlane.xlu0 %1802
          %1804 = vadd.xlane.f32.xlu0 %v1773
          %v1805 = vpop.xlane.xlu0 %1804
          %1806 = vadd.xlane.f32.xlu0 %v1775
          %v1807 = vpop.xlane.xlu0 %1806
          %1808 = vadd.xlane.f32.xlu0 %v1777
          %v1809 = vpop.xlane.xlu0 %1808
          %1810 = vadd.xlane.f32.xlu0 %v1779
          %v1811 = vpop.xlane.xlu0 %1810
          %1812 = vadd.xlane.f32.xlu0 %v1781
          %v1813 = vpop.xlane.xlu0 %1812
          %1814 = vadd.xlane.f32.xlu0 %v1783
          %v1815 = vpop.xlane.xlu0 %1814
          %1816 = vadd.xlane.f32.xlu0 %v1785
          %v1817 = vpop.xlane.xlu0 %1816
          %1818 = vadd.xlane.f32.xlu0 %v1787
          %v1819 = vpop.xlane.xlu0 %1818
          %1820 = vadd.xlane.f32.xlu0 %v1789
          %v1821 = vpop.xlane.xlu0 %1820
          %1822 = vadd.xlane.f32.xlu0 %v1791
          %v1823 = vpop.xlane.xlu0 %1822
          %1824 = vadd.xlane.f32.xlu0 %v1793
          %v1825 = vpop.xlane.xlu0 %1824
          %1826 = vadd.xlane.f32.xlu0 %v1795
          %v1827 = vpop.xlane.xlu0 %1826
          %v1828 = vadd.f32 %v1652, %v1797
          %v1829 = vadd.f32 %v1653, %v1799
          %v1830 = vadd.f32 %v1654, %v1801
          %v1831 = vadd.f32 %v1655, %v1803
          %v1832 = vadd.f32 %v1656, %v1805
          %v1833 = vadd.f32 %v1657, %v1807
          %v1834 = vadd.f32 %v1658, %v1809
          %v1835 = vadd.f32 %v1659, %v1811
          %v1836 = vadd.f32 %v1660, %v1813
          %v1837 = vadd.f32 %v1661, %v1815
          %v1838 = vadd.f32 %v1662, %v1817
          %v1839 = vadd.f32 %v1663, %v1819
          %v1840 = vadd.f32 %v1664, %v1821
          %v1841 = vadd.f32 %v1665, %v1823
          %v1842 = vadd.f32 %v1666, %v1825
          %v1843 = vadd.f32 %v1667, %v1827
          %vm1844 = vcmask 7168
          %1845 = vst.msk [vmem:[#allocation3] sm:$0xff] %vm1844, %v1828
          %1846 = vst.msk [vmem:[#allocation3 + $0x8] sm:$0xff] %vm1844, %v1829
          %1847 = vst.msk [vmem:[#allocation3 + $0x10] sm:$0xff] %vm1844, %v1830
          %1848 = vst.msk [vmem:[#allocation3 + $0x18] sm:$0xff] %vm1844, %v1831
          %1849 = vst.msk [vmem:[#allocation3 + $0x20] sm:$0xff] %vm1844, %v1832
          %1850 = vst.msk [vmem:[#allocation3 + $0x28] sm:$0xff] %vm1844, %v1833
          %1851 = vst.msk [vmem:[#allocation3 + $0x30] sm:$0xff] %vm1844, %v1834
          %1852 = vst.msk [vmem:[#allocation3 + $0x38] sm:$0xff] %vm1844, %v1835
          %1853 = vst.msk [vmem:[#allocation3 + $0x40] sm:$0xff] %vm1844, %v1836
          %1854 = vst.msk [vmem:[#allocation3 + $0x48] sm:$0xff] %vm1844, %v1837
          %1855 = vst.msk [vmem:[#allocation3 + $0x50] sm:$0xff] %vm1844, %v1838
          %1856 = vst.msk [vmem:[#allocation3 + $0x58] sm:$0xff] %vm1844, %v1839
          %1857 = vst.msk [vmem:[#allocation3 + $0x60] sm:$0xff] %vm1844, %v1840
          %1858 = vst.msk [vmem:[#allocation3 + $0x68] sm:$0xff] %vm1844, %v1841
          %1859 = vst.msk [vmem:[#allocation3 + $0x70] sm:$0xff] %vm1844, %v1842
          %1860 = vst.msk [vmem:[#allocation3 + $0x78] sm:$0xff] %vm1844, %v1843
          %1861 = vst.msk [vmem:[#allocation2] sm:$0xff] %vm1844, %v1572
          %1862 = vst.msk [vmem:[#allocation2 + $0x8] sm:$0xff] %vm1844, %v1573
          %1863 = vst.msk [vmem:[#allocation2 + $0x10] sm:$0xff] %vm1844, %v1574
          %1864 = vst.msk [vmem:[#allocation2 + $0x18] sm:$0xff] %vm1844, %v1575
          %1865 = vst.msk [vmem:[#allocation2 + $0x20] sm:$0xff] %vm1844, %v1576
          %1866 = vst.msk [vmem:[#allocation2 + $0x28] sm:$0xff] %vm1844, %v1577
          %1867 = vst.msk [vmem:[#allocation2 + $0x30] sm:$0xff] %vm1844, %v1578
          %1868 = vst.msk [vmem:[#allocation2 + $0x38] sm:$0xff] %vm1844, %v1579
          %1869 = vst.msk [vmem:[#allocation2 + $0x40] sm:$0xff] %vm1844, %v1580
          %1870 = vst.msk [vmem:[#allocation2 + $0x48] sm:$0xff] %vm1844, %v1581
          %1871 = vst.msk [vmem:[#allocation2 + $0x50] sm:$0xff] %vm1844, %v1582
          %1872 = vst.msk [vmem:[#allocation2 + $0x58] sm:$0xff] %vm1844, %v1583
          %1873 = vst.msk [vmem:[#allocation2 + $0x60] sm:$0xff] %vm1844, %v1584
          %1874 = vst.msk [vmem:[#allocation2 + $0x68] sm:$0xff] %vm1844, %v1585
          %1875 = vst.msk [vmem:[#allocation2 + $0x70] sm:$0xff] %vm1844, %v1586
          %1876 = vst.msk [vmem:[#allocation2 + $0x78] sm:$0xff] %vm1844, %v1587
        $region48: #{run.10} parent=35 // pred_fallthru
          _
        // Predicated region
        $region49: #{run.10} parent=35 // pred_check
          %p1877 = pneg %p311
        $region50: #{run.10} parent=35 // pred_check_branch
          %1879 = sbr.rel (%p1877) target = $region52
        $region51: #{run.10} parent=35 // pred_region
          %v1880 = vld [vmem:[#allocation2] sm:$0xff]
          %v1881 = vld [vmem:[#allocation2 + $0x8] sm:$0xff]
          %v1882 = vld [vmem:[#allocation2 + $0x10] sm:$0xff]
          %v1883 = vld [vmem:[#allocation2 + $0x18] sm:$0xff]
          %v1884 = vld [vmem:[#allocation2 + $0x20] sm:$0xff]
          %v1885 = vld [vmem:[#allocation2 + $0x28] sm:$0xff]
          %v1886 = vld [vmem:[#allocation2 + $0x30] sm:$0xff]
          %v1887 = vld [vmem:[#allocation2 + $0x38] sm:$0xff]
          %v1888 = vld [vmem:[#allocation2 + $0x40] sm:$0xff]
          %v1889 = vld [vmem:[#allocation2 + $0x48] sm:$0xff]
          %v1890 = vld [vmem:[#allocation2 + $0x50] sm:$0xff]
          %v1891 = vld [vmem:[#allocation2 + $0x58] sm:$0xff]
          %v1892 = vld [vmem:[#allocation2 + $0x60] sm:$0xff]
          %v1893 = vld [vmem:[#allocation2 + $0x68] sm:$0xff]
          %v1894 = vld [vmem:[#allocation2 + $0x70] sm:$0xff]
          %v1895 = vld [vmem:[#allocation2 + $0x78] sm:$0xff]
          %v1896 = vld [vmem:[#allocation3] sm:$0xff]
          %v1897 = vld [vmem:[#allocation3 + $0x8] sm:$0xff]
          %v1898 = vld [vmem:[#allocation3 + $0x10] sm:$0xff]
          %v1899 = vld [vmem:[#allocation3 + $0x18] sm:$0xff]
          %v1900 = vld [vmem:[#allocation3 + $0x20] sm:$0xff]
          %v1901 = vld [vmem:[#allocation3 + $0x28] sm:$0xff]
          %v1902 = vld [vmem:[#allocation3 + $0x30] sm:$0xff]
          %v1903 = vld [vmem:[#allocation3 + $0x38] sm:$0xff]
          %v1904 = vld [vmem:[#allocation3 + $0x40] sm:$0xff]
          %v1905 = vld [vmem:[#allocation3 + $0x48] sm:$0xff]
          %v1906 = vld [vmem:[#allocation3 + $0x50] sm:$0xff]
          %v1907 = vld [vmem:[#allocation3 + $0x58] sm:$0xff]
          %v1908 = vld [vmem:[#allocation3 + $0x60] sm:$0xff]
          %v1909 = vld [vmem:[#allocation3 + $0x68] sm:$0xff]
          %v1910 = vld [vmem:[#allocation3 + $0x70] sm:$0xff]
          %v1911 = vld [vmem:[#allocation3 + $0x78] sm:$0xff]
          %v1912 = vlog2.pop %v1896
          %v1913 = vmul.f32 %v1912, 0.6931472
          %v1914 = vlog2.pop %v1897
          %v1915 = vmul.f32 %v1914, 0.6931472
          %v1916 = vlog2.pop %v1898
          %v1917 = vmul.f32 %v1916, 0.6931472
          %v1918 = vlog2.pop %v1899
          %v1919 = vmul.f32 %v1918, 0.6931472
          %v1920 = vlog2.pop %v1900
          %v1921 = vmul.f32 %v1920, 0.6931472
          %v1922 = vlog2.pop %v1901
          %v1923 = vmul.f32 %v1922, 0.6931472
          %v1924 = vlog2.pop %v1902
          %v1925 = vmul.f32 %v1924, 0.6931472
          %v1926 = vlog2.pop %v1903
          %v1927 = vmul.f32 %v1926, 0.6931472
          %v1928 = vlog2.pop %v1904
          %v1929 = vmul.f32 %v1928, 0.6931472
          %v1930 = vlog2.pop %v1905
          %v1931 = vmul.f32 %v1930, 0.6931472
          %v1932 = vlog2.pop %v1906
          %v1933 = vmul.f32 %v1932, 0.6931472
          %v1934 = vlog2.pop %v1907
          %v1935 = vmul.f32 %v1934, 0.6931472
          %v1936 = vlog2.pop %v1908
          %v1937 = vmul.f32 %v1936, 0.6931472
          %v1938 = vlog2.pop %v1909
          %v1939 = vmul.f32 %v1938, 0.6931472
          %v1940 = vlog2.pop %v1910
          %v1941 = vmul.f32 %v1940, 0.6931472
          %v1942 = vlog2.pop %v1911
          %v1943 = vmul.f32 %v1942, 0.6931472
          %v1944 = vadd.f32 %v1880, %v1913
          %v1945 = vadd.f32 %v1881, %v1915
          %v1946 = vadd.f32 %v1882, %v1917
          %v1947 = vadd.f32 %v1883, %v1919
          %v1948 = vadd.f32 %v1884, %v1921
          %v1949 = vadd.f32 %v1885, %v1923
          %v1950 = vadd.f32 %v1886, %v1925
          %v1951 = vadd.f32 %v1887, %v1927
          %v1952 = vadd.f32 %v1888, %v1929
          %v1953 = vadd.f32 %v1889, %v1931
          %v1954 = vadd.f32 %v1890, %v1933
          %v1955 = vadd.f32 %v1891, %v1935
          %v1956 = vadd.f32 %v1892, %v1937
          %v1957 = vadd.f32 %v1893, %v1939
          %v1958 = vadd.f32 %v1894, %v1941
          %v1959 = vadd.f32 %v1895, %v1943
          %s1960 = scalar_select %p353, 1, 0
          %v1961 = vstv %s1960
          %vm1962 = vcmp.eq.s32.totalorder %v1961, 1
          %v1963 = vsel %vm1962, %v1944, 0.0
          %v1964 = vsel %vm1962, %v1945, 0.0
          %v1965 = vsel %vm1962, %v1946, 0.0
          %v1966 = vsel %vm1962, %v1947, 0.0
          %v1967 = vsel %vm1962, %v1948, 0.0
          %v1968 = vsel %vm1962, %v1949, 0.0
          %v1969 = vsel %vm1962, %v1950, 0.0
          %v1970 = vsel %vm1962, %v1951, 0.0
          %v1971 = vsel %vm1962, %v1952, 0.0
          %v1972 = vsel %vm1962, %v1953, 0.0
          %v1973 = vsel %vm1962, %v1954, 0.0
          %v1974 = vsel %vm1962, %v1955, 0.0
          %v1975 = vsel %vm1962, %v1956, 0.0
          %v1976 = vsel %vm1962, %v1957, 0.0
          %v1977 = vsel %vm1962, %v1958, 0.0
          %v1978 = vsel %vm1962, %v1959, 0.0
          %vm1979 = vcmask 7168
          %1980 = vst.msk [vmem:[%s309] sm:$0xff] %vm1979, %v1963
          %1981 = vst.msk [vmem:[%s309 + $0x8] sm:$0xff] %vm1979, %v1964
          %1982 = vst.msk [vmem:[%s309 + $0x10] sm:$0xff] %vm1979, %v1965
          %1983 = vst.msk [vmem:[%s309 + $0x18] sm:$0xff] %vm1979, %v1966
          %1984 = vst.msk [vmem:[%s309 + $0x20] sm:$0xff] %vm1979, %v1967
          %1985 = vst.msk [vmem:[%s309 + $0x28] sm:$0xff] %vm1979, %v1968
          %1986 = vst.msk [vmem:[%s309 + $0x30] sm:$0xff] %vm1979, %v1969
          %1987 = vst.msk [vmem:[%s309 + $0x38] sm:$0xff] %vm1979, %v1970
          %1988 = vst.msk [vmem:[%s309 + $0x40] sm:$0xff] %vm1979, %v1971
          %1989 = vst.msk [vmem:[%s309 + $0x48] sm:$0xff] %vm1979, %v1972
          %1990 = vst.msk [vmem:[%s309 + $0x50] sm:$0xff] %vm1979, %v1973
          %1991 = vst.msk [vmem:[%s309 + $0x58] sm:$0xff] %vm1979, %v1974
          %1992 = vst.msk [vmem:[%s309 + $0x60] sm:$0xff] %vm1979, %v1975
          %1993 = vst.msk [vmem:[%s309 + $0x68] sm:$0xff] %vm1979, %v1976
          %1994 = vst.msk [vmem:[%s309 + $0x70] sm:$0xff] %vm1979, %v1977
          %1995 = vst.msk [vmem:[%s309 + $0x78] sm:$0xff] %vm1979, %v1978
        $region52: #{run.10} parent=35 // pred_fallthru
          _
        %s1996 = smul.u32 16, %s22
        %p1997 = scmp.lt.s32.totalorder %s21, 7
        %s1998 = scalar_select %p1997, %s21, 7
        %p1999 = scmp.lt.s32.totalorder %s1996, 15
        %s2000 = scalar_select %p1999, %s1996, 15
        %s2001 = smul.addr %s1998, 16
        %s2002 = sadd.s32 %s2000, %s2001
        %s2003 = smul.addr %s2002, 8
        %s2004 = scalar_lea.vmem %s4, %s2003
        // Predicated region
        $region53: #{run.10} parent=35 // pred_check
          %p2005 = pneg %p160
        $region54: #{run.10} parent=35 // pred_check_branch
          %2007 = sbr.rel (%p2005) target = $region56
        $region55: #{run.10} parent=35 // pred_region
          %s2008 = smul.u32 16, %s22
        $region56: #{run.10} parent=35 // pred_fallthru
          _
      $region36: #{run.10} parent=5 // pred_fallthru
        _
      %p2009 = scmp.le.s32.totalorder 2, %s11
      // Predicated region
      $region57: #{run.10} parent=5 // pred_check
        %p2010 = pneg %p2009
      $region58: #{run.10} parent=5 // pred_check_branch
        %2012 = sbr.rel (%p2010) target = $region60
      $region59: #{run.10} parent=5 // pred_region
        %s2013 = ssub.s32 %s11, 2
        // Predicated region
        $region61: #{run.10} parent=59 // pred_check
          %p2014 = pneg %p166
        $region62: #{run.10} parent=59 // pred_check_branch
          %2016 = sbr.rel (%p2014) target = $region64
        $region63: #{run.10} parent=59 // pred_region
          %s2017 = smul.u32 16, %s25
          %p2018 = scmp.lt.s32.totalorder %s24, 7
          %s2019 = scalar_select %p2018, %s24, 7
          %p2020 = scmp.lt.s32.totalorder %s2017, 15
          %s2021 = scalar_select %p2020, %s2017, 15
          %s2022 = smul.addr %s2019, 16
          %s2023 = sadd.s32 %s2021, %s2022
          %s2024 = smul.addr %s2023, 8
          %s2025 = scalar_lea.vmem %s4, %s2024
        $region64: #{run.10} parent=59 // pred_fallthru
          _
      $region60: #{run.10} parent=5 // pred_fallthru
        _
    $region6: #{run.10} parent=1 // loop_footer
      %s15 = sadd.s32 1, %s11
    $region7: #{run.10} parent=1 // loop_footer_branch
      %10 = sbr.rel target = $region3
    $region8: #{run.10} parent=1 // loop_exit
      _
    %2026 = vsyncpa [#allocation5], 1
    %s2027 = scalar_lea.sflag [#allocation5], 1
    %2028 = vsyncpa %s2027, 1

// kernel: sub.90
$region0: #{sub.90}
  #allocation0 [shape = 's32[1]{0}', space=sflag, size = 0x4, scoped, tag = 'scoped memory for sub.90']
  %s0 = inlined_call_operand.vmem [shape: f32[8,1,128], index: 0, kind: input, shape index: {}]
  %s1 = inlined_call_operand.vmem [shape: f32[8,1,128], index: 1, kind: input, shape index: {}]
  %s2 = inlined_call_operand.vmem [shape: f32[8,1,128], index: 2, kind: output, shape index: {}]
  %v3 = vld [vmem:[%s0] sm:$0x1]
  %v4 = vld [vmem:[%s1] sm:$0x1]
  %5 = xla_tuple %v3, %v4
  %6 = xla_tuple %5
  %v7 = vsub.f32 %v3, %v4
  %8 = xla_tuple %v7
  %9 = vst [vmem:[%s2] sm:$0x1] %v7
  %s10 = scalar_lea.vmem %s0, 1
  %v11 = vld [vmem:[%s10] sm:$0x1]
  %s12 = scalar_lea.vmem %s1, 1
  %v13 = vld [vmem:[%s12] sm:$0x1]
  %14 = xla_tuple %v11, %v13
  %15 = xla_tuple %14
  %v16 = vsub.f32 %v11, %v13
  %17 = xla_tuple %v16
  %s18 = scalar_lea.vmem %s2, 1
  %19 = vst [vmem:[%s18] sm:$0x1] %v16
  %s20 = scalar_lea.vmem %s0, 2
  %v21 = vld [vmem:[%s20] sm:$0x1]
  %s22 = scalar_lea.vmem %s1, 2
  %v23 = vld [vmem:[%s22] sm:$0x1]
  %24 = xla_tuple %v21, %v23
  %25 = xla_tuple %24
  %v26 = vsub.f32 %v21, %v23
  %27 = xla_tuple %v26
  %s28 = scalar_lea.vmem %s2, 2
  %29 = vst [vmem:[%s28] sm:$0x1] %v26
  %s30 = scalar_lea.vmem %s0, 3
  %v31 = vld [vmem:[%s30] sm:$0x1]
  %s32 = scalar_lea.vmem %s1, 3
  %v33 = vld [vmem:[%s32] sm:$0x1]
  %34 = xla_tuple %v31, %v33
  %35 = xla_tuple %34
  %v36 = vsub.f32 %v31, %v33
  %37 = xla_tuple %v36
  %s38 = scalar_lea.vmem %s2, 3
  %39 = vst [vmem:[%s38] sm:$0x1] %v36
  %s40 = scalar_lea.vmem %s0, 4
  %v41 = vld [vmem:[%s40] sm:$0x1]
  %s42 = scalar_lea.vmem %s1, 4
  %v43 = vld [vmem:[%s42] sm:$0x1]
  %44 = xla_tuple %v41, %v43
  %45 = xla_tuple %44
  %v46 = vsub.f32 %v41, %v43
  %47 = xla_tuple %v46
  %s48 = scalar_lea.vmem %s2, 4
  %49 = vst [vmem:[%s48] sm:$0x1] %v46
  %s50 = scalar_lea.vmem %s0, 5
  %v51 = vld [vmem:[%s50] sm:$0x1]
  %s52 = scalar_lea.vmem %s1, 5
  %v53 = vld [vmem:[%s52] sm:$0x1]
  %54 = xla_tuple %v51, %v53
  %55 = xla_tuple %54
  %v56 = vsub.f32 %v51, %v53
  %57 = xla_tuple %v56
  %s58 = scalar_lea.vmem %s2, 5
  %59 = vst [vmem:[%s58] sm:$0x1] %v56
  %s60 = scalar_lea.vmem %s0, 6
  %v61 = vld [vmem:[%s60] sm:$0x1]
  %s62 = scalar_lea.vmem %s1, 6
  %v63 = vld [vmem:[%s62] sm:$0x1]
  %64 = xla_tuple %v61, %v63
  %65 = xla_tuple %64
  %v66 = vsub.f32 %v61, %v63
  %67 = xla_tuple %v66
  %s68 = scalar_lea.vmem %s2, 6
  %69 = vst [vmem:[%s68] sm:$0x1] %v66
  %s70 = scalar_lea.vmem %s0, 7
  %v71 = vld [vmem:[%s70] sm:$0x1]
  %s72 = scalar_lea.vmem %s1, 7
  %v73 = vld [vmem:[%s72] sm:$0x1]
  %74 = xla_tuple %v71, %v73
  %75 = xla_tuple %74
  %v76 = vsub.f32 %v71, %v73
  %77 = xla_tuple %v76
  %s78 = scalar_lea.vmem %s2, 7
  %79 = vst [vmem:[%s78] sm:$0x1] %v76

</llo_original>
